<compile_context>
chip_gen: v6e
topology: v6e:2x2x1
jax: 0.10.0
libtpu: 0.0.40
codegen_flags: <defaults>
</compile_context>

<pallas_src>
import math
from functools import partial

import jax
import jax.numpy as jnp
import numpy as np
from jax.experimental import pallas as pl
from jax.experimental.pallas import tpu as pltpu

EPS = 1e-5  # PyTorch BatchNorm2d default eps


# ------------------------------ Pallas kernels ------------------------------ #

def conv_stats_kernel(p_ref, w_ref, b_ref, oyb_ref, oxb_ref, ryc_ref, rxc_ref,
                      y_ref, st_ref, *, ho, wo):
    """One im2col matmul tile of the phase-decomposed ConvTranspose2d + bias,
    plus per-tile partial BatchNorm statistics (sum / sum-of-squares) over the
    *valid* output positions only (border/padded phase candidates masked)."""
    y = jnp.dot(p_ref[...], w_ref[...], preferred_element_type=jnp.float32)
    y = y + b_ref[...]
    y_ref[...] = y

    # candidate output coordinate of (row, column) = (phase-grid position, phase)
    oy = oyb_ref[...] + ryc_ref[...]          # (TR,1) + (1,CC) -> (TR,CC)
    ox = oxb_ref[...] + rxc_ref[...]
    valid = (oy >= 0) & (oy < ho) & (ox >= 0) & (ox < wo)
    ym = jnp.where(valid, y, 0.0)
    ssum = jnp.sum(ym, axis=0, keepdims=True)
    ssq = jnp.sum(ym * ym, axis=0, keepdims=True)
    st_ref[...] = jnp.concatenate([ssum, ssq], axis=0)[None]


def bn_relu_uph_kernel(a_ref, sc_ref, sh_ref, ah_ref, o_ref):
    """BatchNorm affine + ReLU fused with the H-direction bilinear upsample
    (left matmul by Ah); one batch element per grid step."""
    a = jnp.maximum(a_ref[0] * sc_ref[...] + sh_ref[...], 0.0)
    o_ref[0] = jnp.dot(ah_ref[...], a, preferred_element_type=jnp.float32)


def upw_kernel(t_ref, aw_ref, o_ref):
    """W-direction bilinear upsample (left matmul by Aw)."""
    o_ref[0] = jnp.dot(aw_ref[...], t_ref[0], preferred_element_type=jnp.float32)


# ------------------------------- glue / wrapper ----------------------------- #

def bilinear_matrix(in_size: int, scale: int = 2) -> jnp.ndarray:
    """(scale*in, in) operator reproducing torch F.interpolate(scale_factor=scale,
    mode='bilinear', align_corners=False) along one axis."""
    out_size = in_size * scale
    i = np.arange(out_size, dtype=np.float64)
    src = np.maximum((i + 0.5) / scale - 0.5, 0.0)
    i0 = np.clip(np.floor(src).astype(np.int64), 0, in_size - 1)
    i1 = np.minimum(i0 + 1, in_size - 1)
    lam = src - i0
    A = np.zeros((out_size, in_size), dtype=np.float64)
    np.add.at(A, (np.arange(out_size), i0), 1.0 - lam)
    np.add.at(A, (np.arange(out_size), i1), lam)
    return jnp.asarray(A, dtype=jnp.float32)


@partial(jax.jit, static_argnames=("stride", "padding", "row_tile"))
def decode_block_forward(x_nchw, w_t, bias, gamma, beta, *, stride, padding,
                         row_tile=256):
    """x_nchw: (N, Cin, H, W); w_t: ConvTranspose2d weight (Cin, Cout, KH, KW)."""
    N, Cin, H, W = x_nchw.shape
    _, Cout, KH, KW = w_t.shape
    s, p = stride, padding

    Ho = (H - 1) * s - 2 * p + KH
    Wo = (W - 1) * s - 2 * p + KW
    Ho2, Wo2 = 2 * Ho, 2 * Wo

    # ---------- sub-pixel (phase) decomposition geometry ----------
    kmh, kmw = -(-KH // s), -(-KW // s)                 # taps per phase = ceil(K/s)
    qminh, qmaxh = p // s, (Ho - 1 + p) // s
    qminw, qmaxw = p // s, (Wo - 1 + p) // s
    Qh, Qw = qmaxh - qminh + 1, qmaxw - qminw + 1       # phase-grid extents
    Lh, Rh = max(0, kmh - 1 - qminh), max(0, qmaxh - (H - 1))
    Lw, Rw = max(0, kmw - 1 - qminw), max(0, qmaxw - (W - 1))
    bh, bw = qminh - kmh + 1 + Lh, qminw - kmw + 1 + Lw

    KKC = kmh * kmw * Cin        # im2col contraction (s^2 smaller than dilated conv)
    CC = s * s * Cout            # phases x channels = conv-output lane axis

    # ---------- glue: NHWC, small pad, im2col over the UNdilated input ----------
    x_nhwc = jnp.transpose(x_nchw, (0, 2, 3, 1)).astype(jnp.float32)
    x_pp = jnp.pad(x_nhwc, ((0, 0), (Lh, Rh), (Lw, Rw), (0, 0)))
    cols = [x_pp[:, bh + dy:bh + dy + Qh, bw + dx:bw + dx + Qw, :]
            for dy in range(kmh) for dx in range(kmw)]
    patches = jnp.concatenate(cols, axis=-1).reshape(N * Qh * Qw, KKC)

    ROWS = N * Qh * Qw
    nrt = pl.cdiv(ROWS, row_tile)
    ROWS_PAD = nrt * row_tile
    if ROWS_PAD > ROWS:
        patches = jnp.pad(patches, ((0, ROWS_PAD - ROWS), (0, 0)))

    # ---------- phase-decomposed weight: (kmh*kmw*Cin, s*s*Cout) ----------
    # ky = s*(kmh-1-dy) + ry ; kx = s*(kmw-1-dx) + rx  (zero-pad taps past KH/KW)
    KHp, KWp = s * kmh, s * kmw
    w_pad = jnp.pad(w_t.astype(jnp.float32),
                    ((0, 0), (0, 0), (0, KHp - KH), (0, KWp - KW)))
    w_r = w_pad.reshape(Cin, Cout, kmh, s, kmw, s)      # [ci,co,d_y,ry,d_x,rx]
    wf = jnp.transpose(w_r[:, :, ::-1, :, ::-1, :], (2, 4, 0, 3, 5, 1))
    w_mat = wf.reshape(KKC, CC)                         # [(dy,dx,ci), (ry,rx,co)]
    bias_col = jnp.tile(bias.astype(jnp.float32), s * s).reshape(1, CC)

    # per-row / per-column candidate output coords (static, built host-side)
    rid = np.arange(ROWS_PAD)
    qy = (rid // Qw) % Qh + qminh
    qx = rid % Qw + qminw
    oyb = (s * qy - p).astype(np.int32)
    oxb = (s * qx - p).astype(np.int32)
    oyb[ROWS:] = -(10 ** 6)                             # padded rows never valid
    oyb = jnp.asarray(oyb).reshape(ROWS_PAD, 1)
    oxb = jnp.asarray(oxb).reshape(ROWS_PAD, 1)
    phase = np.arange(CC) // Cout
    ryc = jnp.asarray((phase // s).astype(np.int32)).reshape(1, CC)
    rxc = jnp.asarray((phase % s).astype(np.int32)).reshape(1, CC)

    cparams = pltpu.CompilerParams(dimension_semantics=("parallel",),
                                   vmem_limit_bytes=32 * 1024 * 1024)

    # ---------- kernel A: conv matmul + bias + fused BN partial stats ----------
    y_flat, stats = pl.pallas_call(
        partial(conv_stats_kernel, ho=Ho, wo=Wo),
        grid=(nrt,),
        in_specs=[
            pl.BlockSpec((row_tile, KKC), lambda t: (t, 0)),
            pl.BlockSpec((KKC, CC), lambda t: (0, 0)),
            pl.BlockSpec((1, CC), lambda t: (0, 0)),
            pl.BlockSpec((row_tile, 1), lambda t: (t, 0)),
            pl.BlockSpec((row_tile, 1), lambda t: (t, 0)),
            pl.BlockSpec((1, CC), lambda t: (0, 0)),
            pl.BlockSpec((1, CC), lambda t: (0, 0)),
        ],
        out_specs=[
            pl.BlockSpec((row_tile, CC), lambda t: (t, 0)),
            pl.BlockSpec((1, 2, CC), lambda t: (t, 0, 0)),
        ],
        out_shape=[
            jax.ShapeDtypeStruct((ROWS_PAD, CC), jnp.float32),
            jax.ShapeDtypeStruct((nrt, 2, CC), jnp.float32),
        ],
        compiler_params=cparams,
    )(patches, w_mat, bias_col, oyb, oxb, ryc, rxc)

    # ---------- finalize BN (tiny reduction over per-tile partials) ----------
    cnt = float(N * Ho * Wo)
    s1 = stats[:, 0, :].sum(axis=0).reshape(s * s, Cout).sum(axis=0)
    s2 = stats[:, 1, :].sum(axis=0).reshape(s * s, Cout).sum(axis=0)
    mean = s1 / cnt
    var = s2 / cnt - mean * mean     # biased var; f32 E[x^2]-E[x]^2 is fine at these scales
    inv = gamma * jax.lax.rsqrt(var + EPS)
    scale_c, shift_c = inv, beta - mean * inv

    # ---------- glue: depth-to-space (phase interleave) + border trim ----------
    y = y_flat[:ROWS].reshape(N, Qh, Qw, s, s, Cout)
    y = jnp.transpose(y, (0, 1, 3, 2, 4, 5)).reshape(N, Qh * s, Qw * s, Cout)
    offh, offw = p - s * qminh, p - s * qminw
    y = y[:, offh:offh + Ho, offw:offw + Wo, :]         # (N, Ho, Wo, Cout)

    # ---------- kernel B1: BN affine + ReLU + H-direction upsample ----------
    WoC = Wo * Cout
    act = y.reshape(N, Ho, WoC)
    sc_lane = jnp.tile(scale_c, Wo).reshape(1, WoC)
    sh_lane = jnp.tile(shift_c, Wo).reshape(1, WoC)
    Ah, Aw = bilinear_matrix(Ho), bilinear_matrix(Wo)

    t_h = pl.pallas_call(
        bn_relu_uph_kernel,
        grid=(N,),
        in_specs=[
            pl.BlockSpec((1, Ho, WoC), lambda n: (n, 0, 0)),
            pl.BlockSpec((1, WoC), lambda n: (0, 0)),
            pl.BlockSpec((1, WoC), lambda n: (0, 0)),
            pl.BlockSpec((Ho2, Ho), lambda n: (0, 0)),
        ],
        out_specs=pl.BlockSpec((1, Ho2, WoC), lambda n: (n, 0, 0)),
        out_shape=jax.ShapeDtypeStruct((N, Ho2, WoC), jnp.float32),
        compiler_params=cparams,
    )(act, sc_lane, sh_lane, Ah)

    # ---------- kernel B2: W-direction upsample ----------
    HC = Ho2 * Cout
    t_w_in = jnp.transpose(t_h.reshape(N, Ho2, Wo, Cout),
                           (0, 2, 1, 3)).reshape(N, Wo, HC)
    up = pl.pallas_call(
        upw_kernel,
        grid=(N,),
        in_specs=[
            pl.BlockSpec((1, Wo, HC), lambda n: (n, 0, 0)),
            pl.BlockSpec((Wo2, Wo), lambda n: (0, 0)),
        ],
        out_specs=pl.BlockSpec((1, Wo2, HC), lambda n: (n, 0, 0)),
        out_shape=jax.ShapeDtypeStruct((N, Wo2, HC), jnp.float32),
        compiler_params=cparams,
    )(t_w_in, Aw)

    out = up.reshape(N, Wo2, Ho2, Cout)
    return jnp.transpose(out, (0, 3, 2, 1))             # NCHW: (N, Cout, 2Ho, 2Wo)


# ------------------------------ pure-JAX reference -------------------------- #

def reference_forward(x_nchw, w_t, bias, gamma, beta, *, stride, padding):
    _, _, KH, KW = w_t.shape
    w_conv = jnp.transpose(w_t, (1, 0, 2, 3))[:, :, ::-1, ::-1]    # OIHW, flipped
    y = jax.lax.conv_general_dilated(
        x_nchw, w_conv, window_strides=(1, 1),
        padding=[(KH - 1 - padding,) * 2, (KW - 1 - padding,) * 2],
        lhs_dilation=(stride, stride),
        dimension_numbers=('NCHW', 'OIHW', 'NCHW'))
    y = y + bias[None, :, None, None]
    mean = y.mean(axis=(0, 2, 3), keepdims=True)
    var = ((y - mean) ** 2).mean(axis=(0, 2, 3), keepdims=True)
    y = (y - mean) * jax.lax.rsqrt(var + EPS)
    y = y * gamma[None, :, None, None] + beta[None, :, None, None]
    y = jnp.maximum(y, 0.0)
    Ah, Aw = bilinear_matrix(y.shape[2]), bilinear_matrix(y.shape[3])
    return jnp.einsum('ph,qw,nchw->ncpq', Ah, Aw, y)


# ----------------------------------- main ----------------------------------- #

if __name__ == "__main__":
    # DecodeBlock(in_channel=4, out_channel=8, kernel_size=4, stride=2, padding=1,
    #             activation=ReLU, upsample=F.interpolate)
    N, Cin, H, W = 2, 4, 16, 16
    Cout, K, S, P = 8, 4, 2, 1

    key = jax.random.PRNGKey(0)
    kx, kw, kb, kg, kbt = jax.random.split(key, 5)
    x = jax.random.normal(kx, (N, Cin, H, W), jnp.float32)
    bound = 1.0 / math.sqrt(Cin * K * K)
    w_t = jax.random.uniform(kw, (Cin, Cout, K, K), jnp.float32, -bound, bound)
    bias = jax.random.uniform(kb, (Cout,), jnp.float32, -bound, bound)
    gamma = jax.random.uniform(kg, (Cout,), jnp.float32, 0.5, 1.5)
    beta = 0.1 * jax.random.normal(kbt, (Cout,), jnp.float32)

    out = decode_block_forward(x, w_t, bias, gamma, beta, stride=S, padding=P)
    out = jax.block_until_ready(out)

    Ho = (H - 1) * S - 2 * P + K
    Wo = (W - 1) * S - 2 * P + K
    assert out.shape == (N, Cout, 2 * Ho, 2 * Wo), out.shape

    ref = reference_forward(x, w_t, bias, gamma, beta, stride=S, padding=P)
    np.testing.assert_allclose(np.asarray(out), np.asarray(ref),
                               rtol=2e-4, atol=5e-4)
    print("KERNEL_OK")
</pallas_src>

<mosaic_0001>
module attributes {stable_mosaic.version = 11 : i64} {
  func.func @conv_stats_kernel(%arg0: i32, %arg1: memref<256x16xf32, #tpu.memory_space<vmem>>, %arg2: memref<16x32xf32, #tpu.memory_space<vmem>>, %arg3: memref<1x32xf32, #tpu.memory_space<vmem>>, %arg4: memref<256x1xi32, #tpu.memory_space<vmem>>, %arg5: memref<256x1xi32, #tpu.memory_space<vmem>>, %arg6: memref<1x32xi32, #tpu.memory_space<vmem>>, %arg7: memref<1x32xi32, #tpu.memory_space<vmem>>, %arg8: memref<256x32xf32, #tpu.memory_space<vmem>>, %arg9: memref<1x2x32xf32, #tpu.memory_space<vmem>>) attributes {dimension_semantics = [#tpu.dimension_semantics<parallel>], iteration_bounds = array<i64: 3>, scalar_prefetch = 0 : i64, scratch_operands = 0 : i64, tpu.core_type = #tpu.core_type<tc>, window_params = [{transform_indices = @transform_0, window_bounds = array<i64: 256, 16>}, {pipeline_mode = #tpu.pipeline_mode<synchronous>, transform_indices = @transform_1, window_bounds = array<i64: 16, 32>}, {pipeline_mode = #tpu.pipeline_mode<synchronous>, transform_indices = @transform_2, window_bounds = array<i64: 1, 32>}, {transform_indices = @transform_3, window_bounds = array<i64: 256, 1>}, {transform_indices = @transform_4, window_bounds = array<i64: 256, 1>}, {pipeline_mode = #tpu.pipeline_mode<synchronous>, transform_indices = @transform_5, window_bounds = array<i64: 1, 32>}, {pipeline_mode = #tpu.pipeline_mode<synchronous>, transform_indices = @transform_6, window_bounds = array<i64: 1, 32>}, {transform_indices = @transform_7, window_bounds = array<i64: 256, 32>}, {transform_indices = @transform_8, window_bounds = array<i64: 1, 2, 32>}]} {
    %c0 = arith.constant 0 : index
    %c0_0 = arith.constant 0 : index
    %0 = vector.load %arg1[%c0, %c0_0] : memref<256x16xf32, #tpu.memory_space<vmem>>, vector<256x16xf32>
    %c0_1 = arith.constant 0 : index
    %c0_2 = arith.constant 0 : index
    %1 = vector.load %arg2[%c0_1, %c0_2] : memref<16x32xf32, #tpu.memory_space<vmem>>, vector<16x32xf32>
    %cst = arith.constant dense<0.000000e+00> : vector<256x32xf32>
    %2 = tpu.matmul %0, %1, %cst {dimension_numbers = #tpu.dot_dimension_numbers<[1], [0], [0], [1], [0, 0, 1, 1], [], []>} : vector<256x16xf32>, vector<16x32xf32>, vector<256x32xf32> -> vector<256x32xf32>
    %c0_3 = arith.constant 0 : index
    %c0_4 = arith.constant 0 : index
    %3 = vector.load %arg3[%c0_3, %c0_4] : memref<1x32xf32, #tpu.memory_space<vmem>>, vector<1x32xf32>
    %4 = vector.broadcast %3 : vector<1x32xf32> to vector<256x32xf32>
    %5 = arith.addf %2, %4 : vector<256x32xf32>
    %c0_5 = arith.constant 0 : index
    %c0_6 = arith.constant 0 : index
    %6 = vector.load %arg8[%c0_5, %c0_6] : memref<256x32xf32, #tpu.memory_space<vmem>>, vector<256x32xf32>
    tpu.vector_store %arg8[%c0_5, %c0_6], %5 {strides = array<i32>} : memref<256x32xf32, #tpu.memory_space<vmem>>, vector<256x32xf32>,
    %c0_7 = arith.constant 0 : index
    %c0_8 = arith.constant 0 : index
    %7 = vector.load %arg4[%c0_7, %c0_8] : memref<256x1xi32, #tpu.memory_space<vmem>>, vector<256x1xi32>
    %c0_9 = arith.constant 0 : index
    %c0_10 = arith.constant 0 : index
    %8 = vector.load %arg6[%c0_9, %c0_10] : memref<1x32xi32, #tpu.memory_space<vmem>>, vector<1x32xi32>
    %9 = vector.broadcast %7 : vector<256x1xi32> to vector<256x32xi32>
    %10 = vector.broadcast %8 : vector<1x32xi32> to vector<256x32xi32>
    %11 = arith.addi %9, %10 : vector<256x32xi32>
    %c0_11 = arith.constant 0 : index
    %c0_12 = arith.constant 0 : index
    %12 = vector.load %arg5[%c0_11, %c0_12] : memref<256x1xi32, #tpu.memory_space<vmem>>, vector<256x1xi32>
    %c0_13 = arith.constant 0 : index
    %c0_14 = arith.constant 0 : index
    %13 = vector.load %arg7[%c0_13, %c0_14] : memref<1x32xi32, #tpu.memory_space<vmem>>, vector<1x32xi32>
    %14 = vector.broadcast %12 : vector<256x1xi32> to vector<256x32xi32>
    %15 = vector.broadcast %13 : vector<1x32xi32> to vector<256x32xi32>
    %16 = arith.addi %14, %15 : vector<256x32xi32>
    %c0_i32 = arith.constant 0 : i32
    %17 = vector.broadcast %c0_i32 : i32 to vector<256x32xi32>
    %18 = arith.cmpi sge, %11, %17 : vector<256x32xi32>
    %c32_i32 = arith.constant 32 : i32
    %19 = vector.broadcast %c32_i32 : i32 to vector<256x32xi32>
    %20 = arith.cmpi slt, %11, %19 : vector<256x32xi32>
    %21 = arith.andi %18, %20 : vector<256x32xi1>
    %c0_i32_15 = arith.constant 0 : i32
    %22 = vector.broadcast %c0_i32_15 : i32 to vector<256x32xi32>
    %23 = arith.cmpi sge, %16, %22 : vector<256x32xi32>
    %24 = arith.andi %21, %23 : vector<256x32xi1>
    %c32_i32_16 = arith.constant 32 : i32
    %25 = vector.broadcast %c32_i32_16 : i32 to vector<256x32xi32>
    %26 = arith.cmpi slt, %16, %25 : vector<256x32xi32>
    %27 = arith.andi %24, %26 : vector<256x32xi1>
    %cst_17 = arith.constant 0.000000e+00 : f32
    %28 = vector.broadcast %cst_17 : f32 to vector<256x32xf32>
    %29 = arith.select %27, %5, %28 : vector<256x32xi1>, vector<256x32xf32>
    %cst_18 = arith.constant dense<0.000000e+00> : vector<32xf32>
    %30 = vector.multi_reduction <add>, %29, %cst_18 [0] : vector<256x32xf32> to vector<32xf32>
    %31 = vector.shape_cast %30 : vector<32xf32> to vector<1x32xf32>
    %32 = arith.mulf %29, %29 : vector<256x32xf32>
    %cst_19 = arith.constant dense<0.000000e+00> : vector<32xf32>
    %33 = vector.multi_reduction <add>, %32, %cst_19 [0] : vector<256x32xf32> to vector<32xf32>
    %34 = vector.shape_cast %33 : vector<32xf32> to vector<1x32xf32>
    %35 = tpu.concatenate %31, %34 in 0 : vector<1x32xf32>, vector<1x32xf32> -> vector<2x32xf32>
    %36 = vector.shape_cast %35 : vector<2x32xf32> to vector<1x2x32xf32>
    %c0_20 = arith.constant 0 : index
    %c0_21 = arith.constant 0 : index
    %c0_22 = arith.constant 0 : index
    %37 = vector.load %arg9[%c0_20, %c0_21, %c0_22] : memref<1x2x32xf32, #tpu.memory_space<vmem>>, vector<1x2x32xf32>
    tpu.vector_store %arg9[%c0_20, %c0_21, %c0_22], %36 {strides = array<i32>} : memref<1x2x32xf32, #tpu.memory_space<vmem>>, vector<1x2x32xf32>,
    return
  }
  func.func @transform_0(%arg0: i32) -> (i32, i32) {
    %c0_i32 = arith.constant 0 : i32
    %c0_i32_0 = arith.constant 0 : i32
    return %arg0, %c0_i32 : i32, i32
  }
  func.func @transform_1(%arg0: i32) -> (i32, i32) {
    %c0_i32 = arith.constant 0 : i32
    %c0_i32_0 = arith.constant 0 : i32
    %c0_i32_1 = arith.constant 0 : i32
    return %c0_i32, %c0_i32_0 : i32, i32
  }
  func.func @transform_2(%arg0: i32) -> (i32, i32) {
    %c0_i32 = arith.constant 0 : i32
    %c0_i32_0 = arith.constant 0 : i32
    %c0_i32_1 = arith.constant 0 : i32
    return %c0_i32, %c0_i32_0 : i32, i32
  }
  func.func @transform_3(%arg0: i32) -> (i32, i32) {
    %c0_i32 = arith.constant 0 : i32
    %c0_i32_0 = arith.constant 0 : i32
    return %arg0, %c0_i32 : i32, i32
  }
  func.func @transform_4(%arg0: i32) -> (i32, i32) {
    %c0_i32 = arith.constant 0 : i32
    %c0_i32_0 = arith.constant 0 : i32
    return %arg0, %c0_i32 : i32, i32
  }
  func.func @transform_5(%arg0: i32) -> (i32, i32) {
    %c0_i32 = arith.constant 0 : i32
    %c0_i32_0 = arith.constant 0 : i32
    %c0_i32_1 = arith.constant 0 : i32
    return %c0_i32, %c0_i32_0 : i32, i32
  }
  func.func @transform_6(%arg0: i32) -> (i32, i32) {
    %c0_i32 = arith.constant 0 : i32
    %c0_i32_0 = arith.constant 0 : i32
    %c0_i32_1 = arith.constant 0 : i32
    return %c0_i32, %c0_i32_0 : i32, i32
  }
  func.func @transform_7(%arg0: i32) -> (i32, i32) {
    %c0_i32 = arith.constant 0 : i32
    %c0_i32_0 = arith.constant 0 : i32
    return %arg0, %c0_i32 : i32, i32
  }
  func.func @transform_8(%arg0: i32) -> (i32, i32, i32) {
    %c0_i32 = arith.constant 0 : i32
    %c0_i32_0 = arith.constant 0 : i32
    %c0_i32_1 = arith.constant 0 : i32
    return %arg0, %c0_i32, %c0_i32_0 : i32, i32, i32
  }
}

module attributes {stable_mosaic.version = 11 : i64} {
  func.func @bn_relu_uph_kernel(%arg0: i32, %arg1: memref<1x32x256xf32, #tpu.memory_space<vmem>>, %arg2: memref<1x256xf32, #tpu.memory_space<vmem>>, %arg3: memref<1x256xf32, #tpu.memory_space<vmem>>, %arg4: memref<64x32xf32, #tpu.memory_space<vmem>>, %arg5: memref<1x64x256xf32, #tpu.memory_space<vmem>>) attributes {dimension_semantics = [#tpu.dimension_semantics<parallel>], iteration_bounds = array<i64: 2>, scalar_prefetch = 0 : i64, scratch_operands = 0 : i64, tpu.core_type = #tpu.core_type<tc>, window_params = [{transform_indices = @transform_0, window_bounds = array<i64: 1, 32, 256>}, {pipeline_mode = #tpu.pipeline_mode<synchronous>, transform_indices = @transform_1, window_bounds = array<i64: 1, 256>}, {pipeline_mode = #tpu.pipeline_mode<synchronous>, transform_indices = @transform_2, window_bounds = array<i64: 1, 256>}, {pipeline_mode = #tpu.pipeline_mode<synchronous>, transform_indices = @transform_3, window_bounds = array<i64: 64, 32>}, {transform_indices = @transform_4, window_bounds = array<i64: 1, 64, 256>}]} {
    %c0 = arith.constant 0 : index
    %c0_0 = arith.constant 0 : index
    %c0_1 = arith.constant 0 : index
    %0 = vector.load %arg1[%c0, %c0_0, %c0_1] : memref<1x32x256xf32, #tpu.memory_space<vmem>>, vector<1x32x256xf32>
    %1 = vector.shape_cast %0 : vector<1x32x256xf32> to vector<32x256xf32>
    %c0_2 = arith.constant 0 : index
    %c0_3 = arith.constant 0 : index
    %2 = vector.load %arg2[%c0_2, %c0_3] : memref<1x256xf32, #tpu.memory_space<vmem>>, vector<1x256xf32>
    %3 = vector.broadcast %2 : vector<1x256xf32> to vector<32x256xf32>
    %4 = arith.mulf %1, %3 : vector<32x256xf32>
    %c0_4 = arith.constant 0 : index
    %c0_5 = arith.constant 0 : index
    %5 = vector.load %arg3[%c0_4, %c0_5] : memref<1x256xf32, #tpu.memory_space<vmem>>, vector<1x256xf32>
    %6 = vector.broadcast %5 : vector<1x256xf32> to vector<32x256xf32>
    %7 = arith.addf %4, %6 : vector<32x256xf32>
    %cst = arith.constant 0.000000e+00 : f32
    %8 = vector.broadcast %cst : f32 to vector<32x256xf32>
    %9 = arith.maximumf %7, %8 : vector<32x256xf32>
    %c0_6 = arith.constant 0 : index
    %c0_7 = arith.constant 0 : index
    %10 = vector.load %arg4[%c0_6, %c0_7] : memref<64x32xf32, #tpu.memory_space<vmem>>, vector<64x32xf32>
    %cst_8 = arith.constant dense<0.000000e+00> : vector<64x256xf32>
    %11 = tpu.matmul %10, %9, %cst_8 {dimension_numbers = #tpu.dot_dimension_numbers<[1], [0], [0], [1], [0, 0, 1, 1], [], []>} : vector<64x32xf32>, vector<32x256xf32>, vector<64x256xf32> -> vector<64x256xf32>
    %c0_9 = arith.constant 0 : index
    %c0_10 = arith.constant 0 : index
    %c0_11 = arith.constant 0 : index
    %12 = vector.load %arg5[%c0_9, %c0_10, %c0_11] : memref<1x64x256xf32, #tpu.memory_space<vmem>>, vector<1x64x256xf32>
    %13 = vector.shape_cast %12 : vector<1x64x256xf32> to vector<64x256xf32>
    %14 = vector.shape_cast %11 : vector<64x256xf32> to vector<1x64x256xf32>
    tpu.vector_store %arg5[%c0_9, %c0_10, %c0_11], %14 {strides = array<i32>} : memref<1x64x256xf32, #tpu.memory_space<vmem>>, vector<1x64x256xf32>,
    return
  }
  func.func @transform_0(%arg0: i32) -> (i32, i32, i32) {
    %c0_i32 = arith.constant 0 : i32
    %c0_i32_0 = arith.constant 0 : i32
    %c0_i32_1 = arith.constant 0 : i32
    return %arg0, %c0_i32, %c0_i32_0 : i32, i32, i32
  }
  func.func @transform_1(%arg0: i32) -> (i32, i32) {
    %c0_i32 = arith.constant 0 : i32
    %c0_i32_0 = arith.constant 0 : i32
    %c0_i32_1 = arith.constant 0 : i32
    return %c0_i32, %c0_i32_0 : i32, i32
  }
  func.func @transform_2(%arg0: i32) -> (i32, i32) {
    %c0_i32 = arith.constant 0 : i32
    %c0_i32_0 = arith.constant 0 : i32
    %c0_i32_1 = arith.constant 0 : i32
    return %c0_i32, %c0_i32_0 : i32, i32
  }
  func.func @transform_3(%arg0: i32) -> (i32, i32) {
    %c0_i32 = arith.constant 0 : i32
    %c0_i32_0 = arith.constant 0 : i32
    %c0_i32_1 = arith.constant 0 : i32
    return %c0_i32, %c0_i32_0 : i32, i32
  }
  func.func @transform_4(%arg0: i32) -> (i32, i32, i32) {
    %c0_i32 = arith.constant 0 : i32
    %c0_i32_0 = arith.constant 0 : i32
    %c0_i32_1 = arith.constant 0 : i32
    return %arg0, %c0_i32, %c0_i32_0 : i32, i32, i32
  }
}

module attributes {stable_mosaic.version = 11 : i64} {
  func.func @upw_kernel(%arg0: i32, %arg1: memref<1x32x512xf32, #tpu.memory_space<vmem>>, %arg2: memref<64x32xf32, #tpu.memory_space<vmem>>, %arg3: memref<1x64x512xf32, #tpu.memory_space<vmem>>) attributes {dimension_semantics = [#tpu.dimension_semantics<parallel>], iteration_bounds = array<i64: 2>, scalar_prefetch = 0 : i64, scratch_operands = 0 : i64, tpu.core_type = #tpu.core_type<tc>, window_params = [{transform_indices = @transform_0, window_bounds = array<i64: 1, 32, 512>}, {pipeline_mode = #tpu.pipeline_mode<synchronous>, transform_indices = @transform_1, window_bounds = array<i64: 64, 32>}, {transform_indices = @transform_2, window_bounds = array<i64: 1, 64, 512>}]} {
    %c0 = arith.constant 0 : index
    %c0_0 = arith.constant 0 : index
    %0 = vector.load %arg2[%c0, %c0_0] : memref<64x32xf32, #tpu.memory_space<vmem>>, vector<64x32xf32>
    %c0_1 = arith.constant 0 : index
    %c0_2 = arith.constant 0 : index
    %c0_3 = arith.constant 0 : index
    %1 = vector.load %arg1[%c0_1, %c0_2, %c0_3] : memref<1x32x512xf32, #tpu.memory_space<vmem>>, vector<1x32x512xf32>
    %2 = vector.shape_cast %1 : vector<1x32x512xf32> to vector<32x512xf32>
    %cst = arith.constant dense<0.000000e+00> : vector<64x512xf32>
    %3 = tpu.matmul %0, %2, %cst {dimension_numbers = #tpu.dot_dimension_numbers<[1], [0], [0], [1], [0, 0, 1, 1], [], []>} : vector<64x32xf32>, vector<32x512xf32>, vector<64x512xf32> -> vector<64x512xf32>
    %c0_4 = arith.constant 0 : index
    %c0_5 = arith.constant 0 : index
    %c0_6 = arith.constant 0 : index
    %4 = vector.load %arg3[%c0_4, %c0_5, %c0_6] : memref<1x64x512xf32, #tpu.memory_space<vmem>>, vector<1x64x512xf32>
    %5 = vector.shape_cast %4 : vector<1x64x512xf32> to vector<64x512xf32>
    %6 = vector.shape_cast %3 : vector<64x512xf32> to vector<1x64x512xf32>
    tpu.vector_store %arg3[%c0_4, %c0_5, %c0_6], %6 {strides = array<i32>} : memref<1x64x512xf32, #tpu.memory_space<vmem>>, vector<1x64x512xf32>,
    return
  }
  func.func @transform_0(%arg0: i32) -> (i32, i32, i32) {
    %c0_i32 = arith.constant 0 : i32
    %c0_i32_0 = arith.constant 0 : i32
    %c0_i32_1 = arith.constant 0 : i32
    return %arg0, %c0_i32, %c0_i32_0 : i32, i32, i32
  }
  func.func @transform_1(%arg0: i32) -> (i32, i32) {
    %c0_i32 = arith.constant 0 : i32
    %c0_i32_0 = arith.constant 0 : i32
    %c0_i32_1 = arith.constant 0 : i32
    return %c0_i32, %c0_i32_0 : i32, i32
  }
  func.func @transform_2(%arg0: i32) -> (i32, i32, i32) {
    %c0_i32 = arith.constant 0 : i32
    %c0_i32_0 = arith.constant 0 : i32
    %c0_i32_1 = arith.constant 0 : i32
    return %arg0, %c0_i32, %c0_i32_0 : i32, i32, i32
  }
}

</mosaic_0001>

<llo_original>
// kernel: tile.18
$region0: #{tile.18}
  #allocation2 [shape = 's32[1]{0}', space=sflag, size = 0x4, scoped, tag = 'scoped memory for tile.18']
  %s0 = inlined_call_operand.hbm [shape: f32[8], index: 0, kind: input, shape index: {}]
  %s1 = inlined_call_operand.vmem [shape: f32[4,8], index: 1, kind: output, shape index: {}]
  $region1: #{tile.18} parent=0
    #allocation0 [shape = 'u8[512]{0}', space=vmem, size = 0x400, scoped, tag = 'operand span for operand 0']
    #allocation1 [shape = 's32[1]{0}', space=sflag, size = 0x4, scoped, tag = 'scoped memory for tile.18']
    %2 = vsyncpa [#allocation1], 0
    // Predicated region
    $region2: #{tile.18} parent=1 // pred_check
      _
    $region3: #{tile.18} parent=1 // pred_check_branch
      %4 = sbr.rel (0) target = $region5
    $region4: #{tile.18} parent=1 // pred_region
      %s6 = ssub.s32 16, 16
      %7 = vsyncadd [#allocation1], %s6
      %s9 = sshll.u32 [#allocation0], 4
      %s10 = int_to_ptr.vmem [resolvable:$true] %s9
      %12 = dma.hbm_to_vmem [thread:$0]  %s0, 16, %s10, [#allocation1]
    $region5: #{tile.18} parent=1 // pred_fallthru
      _
    // Predicated region
    $region6: #{tile.18} parent=1 // pred_check
      _
    $region7: #{tile.18} parent=1 // pred_check_branch
      %14 = sbr.rel (0) target = $region9
    $region8: #{tile.18} parent=1 // pred_region
      %15 = dma.done [#allocation1], 16
    $region9: #{tile.18} parent=1 // pred_fallthru
      _
    %v16 = vld [vmem:[#allocation0] ss:$0 sm:$0xff]
    %17 = vst [vmem:[%s1] sm:$0xf] %v16
    %18 = vsyncpa [#allocation1], 1

// kernel: tile.19
$region0: #{tile.19}
  %s0 = inlined_call_operand.vmem [shape: f32[4,8], index: 0, kind: input, shape index: {}]
  %s1 = inlined_call_operand.vmem [shape: f32[1,32], index: 1, kind: output, shape index: {}]
  $region1: #{tile.19} parent=0
    #allocation0 [shape = 'u8[4096]{0}', space=vmem, size = 0x1000, scoped, tag = 'scoped mem for output reshape']
    #allocation1 [shape = 'u8[4096]{0}', space=vmem, size = 0x1000, scoped, tag = 'scoped mem for input reshape']
    %s3 = sshll.u32 1, 4
    %s4 = ssub.s32 %s3, 1
    %v5 = vld [vmem:[%s0] sm:%s4]
    %6 = vst [vmem:[#allocation1] sm:%s4] %v5
    %v7 = vld [vmem:[#allocation1] sm:$0x1]
    %vm8 = vcmask 64512
    %9 = vst.msk [vmem:[#allocation0] sm:$0x1] %vm8, %v7
    %s10 = scalar_lea.vmem [#allocation1], 3
    %v11 = vld [vmem:[%s10] sm:$0x1]
    %12 = vrot.lane.b32.xlu0 %v11, 24
    %v13 = vpop.permute.xlu0 %12
    %vm14 = vcmask 261312
    %15 = vst.msk [vmem:[#allocation0] sm:$0x1] %vm14, %v13
    %s16 = scalar_lea.vmem [#allocation1], 2
    %v17 = vld [vmem:[%s16] sm:$0x1]
    %18 = vrot.lane.b32.xlu0 %v17, 16
    %v19 = vpop.permute.xlu0 %18
    %vm20 = vcmask 195712
    %21 = vst.msk [vmem:[#allocation0] sm:$0x1] %vm20, %v19
    %s22 = scalar_lea.vmem [#allocation1], 1
    %v23 = vld [vmem:[%s22] sm:$0x1]
    %24 = vrot.lane.b32.xlu0 %v23, 8
    %v25 = vpop.permute.xlu0 %24
    %vm26 = vcmask 130112
    %27 = vst.msk [vmem:[#allocation0] sm:$0x1] %vm26, %v25
    %s29 = sshll.u32 1, 1
    %s30 = ssub.s32 %s29, 1
    %v32 = vld [vmem:[#allocation0] sm:%s30]
    %s33 = sshll.u32 1, 1
    %s34 = ssub.s32 %s33, 1
    %35 = vst [vmem:[%s1] sm:%s34] %v32

// kernel: tile.28
$region0: #{tile.28}
  #allocation0 [shape = 's32[1]{0}', space=sflag, size = 0x4, scoped, tag = 'scoped memory for tile.28']
  %s0 = inlined_call_operand.vmem [shape: f32[8], index: 0, kind: input, shape index: {}]
  %s1 = inlined_call_operand.vmem [shape: f32[32,8], index: 1, kind: output, shape index: {}]
  // Predicated region
  $region2: #{tile.28} parent=0 // pred_check
    _
  $region3: #{tile.28} parent=0 // pred_check_branch
    %3 = sbr.rel (0) target = $region5
  $region4: #{tile.28} parent=0 // pred_region
    _
  $region5: #{tile.28} parent=0 // pred_fallthru
    _
  %v4 = vld [vmem:[%s0] ss:$0 sm:$0xff]
  %5 = vst [vmem:[%s1] sm:$0xff] %v4
  %s6 = scalar_lea.vmem %s1, 8
  %7 = vst [vmem:[%s6] sm:$0xff] %v4
  %s8 = scalar_lea.vmem %s1, 16
  %9 = vst [vmem:[%s8] sm:$0xff] %v4
  %s10 = scalar_lea.vmem %s1, 24
  %11 = vst [vmem:[%s10] sm:$0xff] %v4

// kernel: tile.29
$region0: #{tile.29}
  %s0 = inlined_call_operand.vmem [shape: f32[32,8], index: 0, kind: input, shape index: {}]
  %s1 = inlined_call_operand.vmem [shape: f32[1,256], index: 1, kind: output, shape index: {}]
  $region1: #{tile.29} parent=0
    #allocation0 [shape = 'u8[8192]{0}', space=vmem, size = 0x2000, scoped, tag = 'scoped mem for output reshape']
    %s2 = smov 3
    %v3 = vld [vmem:[%s0] ss:$16 sm:%s2]
    %vm4 = vcmask 64512
    %5 = vst.msk [vmem:[#allocation0] ss:$8 sm:$0x3] %vm4, %v3
    %s6 = scalar_lea.vmem %s0, 15
    %s7 = smov 3
    %v8 = vld [vmem:[%s6] ss:$16 sm:%s7]
    %9 = vrot.lane.b32.xlu0 %v8, 120
    %v10 = vpop.permute.xlu0 %9
    %vm11 = vcmask 1048512
    %12 = vst.msk [vmem:[#allocation0] ss:$8 sm:$0x3] %vm11, %v10
    %s13 = scalar_lea.vmem %s0, 14
    %s14 = smov 3
    %v15 = vld [vmem:[%s13] ss:$16 sm:%s14]
    %16 = vrot.lane.b32.xlu0 %v15, 112
    %v17 = vpop.permute.xlu0 %16
    %vm18 = vcmask 982912
    %19 = vst.msk [vmem:[#allocation0] ss:$8 sm:$0x3] %vm18, %v17
    %s20 = scalar_lea.vmem %s0, 13
    %s21 = smov 3
    %v22 = vld [vmem:[%s20] ss:$16 sm:%s21]
    %23 = vrot.lane.b32.xlu0 %v22, 104
    %v24 = vpop.permute.xlu0 %23
    %vm25 = vcmask 917312
    %26 = vst.msk [vmem:[#allocation0] ss:$8 sm:$0x3] %vm25, %v24
    %s27 = scalar_lea.vmem %s0, 12
    %s28 = smov 3
    %v29 = vld [vmem:[%s27] ss:$16 sm:%s28]
    %30 = vrot.lane.b32.xlu0 %v29, 96
    %v31 = vpop.permute.xlu0 %30
    %vm32 = vcmask 851712
    %33 = vst.msk [vmem:[#allocation0] ss:$8 sm:$0x3] %vm32, %v31
    %s34 = scalar_lea.vmem %s0, 11
    %s35 = smov 3
    %v36 = vld [vmem:[%s34] ss:$16 sm:%s35]
    %37 = vrot.lane.b32.xlu0 %v36, 88
    %v38 = vpop.permute.xlu0 %37
    %vm39 = vcmask 786112
    %40 = vst.msk [vmem:[#allocation0] ss:$8 sm:$0x3] %vm39, %v38
    %s41 = scalar_lea.vmem %s0, 10
    %s42 = smov 3
    %v43 = vld [vmem:[%s41] ss:$16 sm:%s42]
    %44 = vrot.lane.b32.xlu0 %v43, 80
    %v45 = vpop.permute.xlu0 %44
    %vm46 = vcmask 720512
    %47 = vst.msk [vmem:[#allocation0] ss:$8 sm:$0x3] %vm46, %v45
    %s48 = scalar_lea.vmem %s0, 9
    %s49 = smov 3
    %v50 = vld [vmem:[%s48] ss:$16 sm:%s49]
    %51 = vrot.lane.b32.xlu0 %v50, 72
    %v52 = vpop.permute.xlu0 %51
    %vm53 = vcmask 654912
    %54 = vst.msk [vmem:[#allocation0] ss:$8 sm:$0x3] %vm53, %v52
    %s55 = scalar_lea.vmem %s0, 8
    %s56 = smov 3
    %v57 = vld [vmem:[%s55] ss:$16 sm:%s56]
    %58 = vrot.lane.b32.xlu0 %v57, 64
    %v59 = vpop.permute.xlu0 %58
    %vm60 = vcmask 589312
    %61 = vst.msk [vmem:[#allocation0] ss:$8 sm:$0x3] %vm60, %v59
    %s62 = scalar_lea.vmem %s0, 7
    %s63 = smov 3
    %v64 = vld [vmem:[%s62] ss:$16 sm:%s63]
    %65 = vrot.lane.b32.xlu0 %v64, 56
    %v66 = vpop.permute.xlu0 %65
    %vm67 = vcmask 523712
    %68 = vst.msk [vmem:[#allocation0] ss:$8 sm:$0x3] %vm67, %v66
    %s69 = scalar_lea.vmem %s0, 6
    %s70 = smov 3
    %v71 = vld [vmem:[%s69] ss:$16 sm:%s70]
    %72 = vrot.lane.b32.xlu0 %v71, 48
    %v73 = vpop.permute.xlu0 %72
    %vm74 = vcmask 458112
    %75 = vst.msk [vmem:[#allocation0] ss:$8 sm:$0x3] %vm74, %v73
    %s76 = scalar_lea.vmem %s0, 5
    %s77 = smov 3
    %v78 = vld [vmem:[%s76] ss:$16 sm:%s77]
    %79 = vrot.lane.b32.xlu0 %v78, 40
    %v80 = vpop.permute.xlu0 %79
    %vm81 = vcmask 392512
    %82 = vst.msk [vmem:[#allocation0] ss:$8 sm:$0x3] %vm81, %v80
    %s83 = scalar_lea.vmem %s0, 4
    %s84 = smov 3
    %v85 = vld [vmem:[%s83] ss:$16 sm:%s84]
    %86 = vrot.lane.b32.xlu0 %v85, 32
    %v87 = vpop.permute.xlu0 %86
    %vm88 = vcmask 326912
    %89 = vst.msk [vmem:[#allocation0] ss:$8 sm:$0x3] %vm88, %v87
    %s90 = scalar_lea.vmem %s0, 3
    %s91 = smov 3
    %v92 = vld [vmem:[%s90] ss:$16 sm:%s91]
    %93 = vrot.lane.b32.xlu0 %v92, 24
    %v94 = vpop.permute.xlu0 %93
    %vm95 = vcmask 261312
    %96 = vst.msk [vmem:[#allocation0] ss:$8 sm:$0x3] %vm95, %v94
    %s97 = scalar_lea.vmem %s0, 2
    %s98 = smov 3
    %v99 = vld [vmem:[%s97] ss:$16 sm:%s98]
    %100 = vrot.lane.b32.xlu0 %v99, 16
    %v101 = vpop.permute.xlu0 %100
    %vm102 = vcmask 195712
    %103 = vst.msk [vmem:[#allocation0] ss:$8 sm:$0x3] %vm102, %v101
    %s104 = scalar_lea.vmem %s0, 1
    %s105 = smov 3
    %v106 = vld [vmem:[%s104] ss:$16 sm:%s105]
    %107 = vrot.lane.b32.xlu0 %v106, 8
    %v108 = vpop.permute.xlu0 %107
    %vm109 = vcmask 130112
    %110 = vst.msk [vmem:[#allocation0] ss:$8 sm:$0x3] %vm109, %v108
    %s112 = sshll.u32 1, 1
    %s113 = ssub.s32 %s112, 1
    %v115 = vld [vmem:[#allocation0] sm:%s113]
    %s116 = sshll.u32 1, 1
    %s117 = ssub.s32 %s116, 1
    %118 = vst [vmem:[%s1] sm:%s117] %v115
    %s119 = scalar_lea.vmem [#allocation0], 8
    %v120 = vld [vmem:[%s119] sm:%s113]
    %s121 = sshll.u32 1, 1
    %s122 = ssub.s32 %s121, 1
    %s123 = scalar_lea.vmem %s1, 1
    %124 = vst [vmem:[%s123] sm:%s122] %v120

// kernel: decode_block_forward.3
$region0: #{decode_block_forward.3}
  #allocation0 [shape = 'u32[]', space=smem, size = 0x4, offset = 0x4, fixed_abs, tag = 'smem constant byte address 0x4 - core index']
  #allocation1 [shape = 'u32[144,128]{1,0:T(1,128)}', space=vmem, size = 0x12000, scoped, tag = 'internal scratch']
  %s0 = inlined_call_operand.vmem [shape: f32[768,16], index: 0, kind: input, shape index: {}]
  %s1 = inlined_call_operand.vmem [shape: f32[16,32], index: 1, kind: input, shape index: {}]
  %s2 = inlined_call_operand.vmem [shape: f32[1,32], index: 2, kind: input, shape index: {}]
  %s3 = inlined_call_operand.vmem [shape: s32[768,1], index: 3, kind: input, shape index: {}]
  %s4 = inlined_call_operand.vmem [shape: s32[768,1], index: 4, kind: input, shape index: {}]
  %s5 = inlined_call_operand.vmem [shape: s32[1,32], index: 5, kind: input, shape index: {}]
  %s6 = inlined_call_operand.vmem [shape: s32[1,32], index: 6, kind: input, shape index: {}]
  %s7 = inlined_call_operand.vmem [shape: f32[768,32], index: 7, kind: output, shape index: {0}]
  %s8 = inlined_call_operand.vmem [shape: f32[3,2,32], index: 8, kind: output, shape index: {1}]
  %9 = xla_tuple %s7, %s8
  %s10 = sld [smem:[#allocation0]]
  $region69: #{decode_block_forward.3} parent=0
    _
  %s12 = ssub.s32 1, %s10
  %s13 = scalar_select 0, %s12, %s10
  loop: start=0, step=1, limit=5
  $region2: #{decode_block_forward.3} parent=0 // loop_pre_header
    _
  $region3: #{decode_block_forward.3} parent=0 // loop_header
    %s15 = sphi 0, %s19
    %p16 = scmp.ge.s32.totalorder %s15, 5
    %s25 = sphi 0, %s27
    %s28 = sphi 0, %s25
    %s29 = sphi 0, %s28
    %s45 = sphi 0, %s29
    %s49 = sphi 0, %s49
    %s51 = sphi 0, %s49
    %s52 = sphi 0, %s51
    %s66 = sphi 0, %s52
    %s70 = sphi 0, %s70
    %s72 = sphi 0, %s70
    %s73 = sphi 0, %s72
    %s87 = sphi 0, %s73
    %s93 = sphi 0, %s95
    %s96 = sphi 0, %s93
    %s97 = sphi 0, %s96
    %s113 = sphi 0, %s97
    %s119 = sphi 0, %s121
    %s122 = sphi 0, %s119
    %s123 = sphi 0, %s122
    %s139 = sphi 0, %s123
    %s143 = sphi 0, %s143
    %s145 = sphi 0, %s143
    %s146 = sphi 0, %s145
    %s160 = sphi 0, %s146
    %s164 = sphi 0, %s164
    %s166 = sphi 0, %s164
    %s167 = sphi 0, %s166
    %s181 = sphi 0, %s167
    %s187 = sphi 0, %s189
    %s190 = sphi 0, %s187
    %s191 = sphi 0, %s190
    %s207 = sphi 0, %s191
    %s213 = sphi 0, %s215
    %s216 = sphi 0, %s213
    %s217 = sphi 0, %s216
    %s233 = sphi 0, %s217
  $region4: #{decode_block_forward.3} parent=0 // loop_header_branch
    %18 = sbr.rel (%p16) target = $region8
  $region5: #{decode_block_forward.3} parent=0 // loop_body
    %s20 = ssub.s32 %s15, 1
    %s21 = ssub.s32 %s15, 2
    %s22 = sadd.s32 %s15, 1
    %s23 = ssub.s32 %s15, %s22
    %p24 = scmp.eq.s32.totalorder %s23, 0
    %s26 = sadd.s32 %s25, 1
    %s27 = scalar_select %p24, %s25, %s26
    %p30 = pneg %p24
    %p31 = scmp.eq.s32.totalorder %s15, 2
    %p32 = por %p30, %p31
    %p33 = scmp.ne.s32.totalorder %s25, %s28
    %p34 = scmp.eq.s32.totalorder %s15, 0
    %p35 = por %p33, %p34
    %p36 = scmp.ne.s32.totalorder %s25, %s28
    %p37 = scmp.eq.s32.totalorder %s20, 2
    %p38 = por %p36, %p37
    %p39 = scmp.ne.s32.totalorder %s28, %s29
    %p40 = scmp.eq.s32.totalorder %s20, 0
    %p41 = por %p39, %p40
    %p42 = scmp.ne.s32.totalorder %s28, %s29
    %p43 = scmp.eq.s32.totalorder %s21, 2
    %p44 = por %p42, %p43
    %p46 = scmp.ne.s32.totalorder %s29, %s45
    %p47 = scmp.eq.s32.totalorder %s21, 0
    %p48 = por %p46, %p47
    %s50 = sadd.s32 %s49, 1
    %p53 = scmp.eq.s32.totalorder %s15, 2
    %p54 = scmp.ne.s32.totalorder %s49, %s51
    %p55 = scmp.eq.s32.totalorder %s15, 0
    %p56 = por %p54, %p55
    %p57 = scmp.ne.s32.totalorder %s49, %s51
    %p58 = scmp.eq.s32.totalorder %s20, 2
    %p59 = por %p57, %p58
    %p60 = scmp.ne.s32.totalorder %s51, %s52
    %p61 = scmp.eq.s32.totalorder %s20, 0
    %p62 = por %p60, %p61
    %p63 = scmp.ne.s32.totalorder %s51, %s52
    %p64 = scmp.eq.s32.totalorder %s21, 2
    %p65 = por %p63, %p64
    %p67 = scmp.ne.s32.totalorder %s52, %s66
    %p68 = scmp.eq.s32.totalorder %s21, 0
    %p69 = por %p67, %p68
    %s71 = sadd.s32 %s70, 1
    %p74 = scmp.eq.s32.totalorder %s15, 2
    %p75 = scmp.ne.s32.totalorder %s70, %s72
    %p76 = scmp.eq.s32.totalorder %s15, 0
    %p77 = por %p75, %p76
    %p78 = scmp.ne.s32.totalorder %s70, %s72
    %p79 = scmp.eq.s32.totalorder %s20, 2
    %p80 = por %p78, %p79
    %p81 = scmp.ne.s32.totalorder %s72, %s73
    %p82 = scmp.eq.s32.totalorder %s20, 0
    %p83 = por %p81, %p82
    %p84 = scmp.ne.s32.totalorder %s72, %s73
    %p85 = scmp.eq.s32.totalorder %s21, 2
    %p86 = por %p84, %p85
    %p88 = scmp.ne.s32.totalorder %s73, %s87
    %p89 = scmp.eq.s32.totalorder %s21, 0
    %p90 = por %p88, %p89
    %s91 = ssub.s32 %s15, %s22
    %p92 = scmp.eq.s32.totalorder %s91, 0
    %s94 = sadd.s32 %s93, 1
    %s95 = scalar_select %p92, %s93, %s94
    %p98 = pneg %p92
    %p99 = scmp.eq.s32.totalorder %s15, 2
    %p100 = por %p98, %p99
    %p101 = scmp.ne.s32.totalorder %s93, %s96
    %p102 = scmp.eq.s32.totalorder %s15, 0
    %p103 = por %p101, %p102
    %p104 = scmp.ne.s32.totalorder %s93, %s96
    %p105 = scmp.eq.s32.totalorder %s20, 2
    %p106 = por %p104, %p105
    %p107 = scmp.ne.s32.totalorder %s96, %s97
    %p108 = scmp.eq.s32.totalorder %s20, 0
    %p109 = por %p107, %p108
    %p110 = scmp.ne.s32.totalorder %s96, %s97
    %p111 = scmp.eq.s32.totalorder %s21, 2
    %p112 = por %p110, %p111
    %p114 = scmp.ne.s32.totalorder %s97, %s113
    %p115 = scmp.eq.s32.totalorder %s21, 0
    %p116 = por %p114, %p115
    %s117 = ssub.s32 %s15, %s22
    %p118 = scmp.eq.s32.totalorder %s117, 0
    %s120 = sadd.s32 %s119, 1
    %s121 = scalar_select %p118, %s119, %s120
    %p124 = pneg %p118
    %p125 = scmp.eq.s32.totalorder %s15, 2
    %p126 = por %p124, %p125
    %p127 = scmp.ne.s32.totalorder %s119, %s122
    %p128 = scmp.eq.s32.totalorder %s15, 0
    %p129 = por %p127, %p128
    %p130 = scmp.ne.s32.totalorder %s119, %s122
    %p131 = scmp.eq.s32.totalorder %s20, 2
    %p132 = por %p130, %p131
    %p133 = scmp.ne.s32.totalorder %s122, %s123
    %p134 = scmp.eq.s32.totalorder %s20, 0
    %p135 = por %p133, %p134
    %p136 = scmp.ne.s32.totalorder %s122, %s123
    %p137 = scmp.eq.s32.totalorder %s21, 2
    %p138 = por %p136, %p137
    %p140 = scmp.ne.s32.totalorder %s123, %s139
    %p141 = scmp.eq.s32.totalorder %s21, 0
    %p142 = por %p140, %p141
    %s144 = sadd.s32 %s143, 1
    %p147 = scmp.eq.s32.totalorder %s15, 2
    %p148 = scmp.ne.s32.totalorder %s143, %s145
    %p149 = scmp.eq.s32.totalorder %s15, 0
    %p150 = por %p148, %p149
    %p151 = scmp.ne.s32.totalorder %s143, %s145
    %p152 = scmp.eq.s32.totalorder %s20, 2
    %p153 = por %p151, %p152
    %p154 = scmp.ne.s32.totalorder %s145, %s146
    %p155 = scmp.eq.s32.totalorder %s20, 0
    %p156 = por %p154, %p155
    %p157 = scmp.ne.s32.totalorder %s145, %s146
    %p158 = scmp.eq.s32.totalorder %s21, 2
    %p159 = por %p157, %p158
    %p161 = scmp.ne.s32.totalorder %s146, %s160
    %p162 = scmp.eq.s32.totalorder %s21, 0
    %p163 = por %p161, %p162
    %s165 = sadd.s32 %s164, 1
    %p168 = scmp.eq.s32.totalorder %s15, 2
    %p169 = scmp.ne.s32.totalorder %s164, %s166
    %p170 = scmp.eq.s32.totalorder %s15, 0
    %p171 = por %p169, %p170
    %p172 = scmp.ne.s32.totalorder %s164, %s166
    %p173 = scmp.eq.s32.totalorder %s20, 2
    %p174 = por %p172, %p173
    %p175 = scmp.ne.s32.totalorder %s166, %s167
    %p176 = scmp.eq.s32.totalorder %s20, 0
    %p177 = por %p175, %p176
    %p178 = scmp.ne.s32.totalorder %s166, %s167
    %p179 = scmp.eq.s32.totalorder %s21, 2
    %p180 = por %p178, %p179
    %p182 = scmp.ne.s32.totalorder %s167, %s181
    %p183 = scmp.eq.s32.totalorder %s21, 0
    %p184 = por %p182, %p183
    %s185 = ssub.s32 %s15, %s22
    %p186 = scmp.eq.s32.totalorder %s185, 0
    %s188 = sadd.s32 %s187, 1
    %s189 = scalar_select %p186, %s187, %s188
    %p192 = pneg %p186
    %p193 = scmp.eq.s32.totalorder %s15, 2
    %p194 = por %p192, %p193
    %p195 = scmp.ne.s32.totalorder %s187, %s190
    %p196 = scmp.eq.s32.totalorder %s15, 0
    %p197 = por %p195, %p196
    %p198 = scmp.ne.s32.totalorder %s187, %s190
    %p199 = scmp.eq.s32.totalorder %s20, 2
    %p200 = por %p198, %p199
    %p201 = scmp.ne.s32.totalorder %s190, %s191
    %p202 = scmp.eq.s32.totalorder %s20, 0
    %p203 = por %p201, %p202
    %p204 = scmp.ne.s32.totalorder %s190, %s191
    %p205 = scmp.eq.s32.totalorder %s21, 2
    %p206 = por %p204, %p205
    %p208 = scmp.ne.s32.totalorder %s191, %s207
    %p209 = scmp.eq.s32.totalorder %s21, 0
    %p210 = por %p208, %p209
    %s211 = ssub.s32 %s15, %s22
    %p212 = scmp.eq.s32.totalorder %s211, 0
    %s214 = sadd.s32 %s213, 1
    %s215 = scalar_select %p212, %s213, %s214
    %p218 = pneg %p212
    %p219 = scmp.eq.s32.totalorder %s15, 2
    %p220 = por %p218, %p219
    %p221 = scmp.ne.s32.totalorder %s213, %s216
    %p222 = scmp.eq.s32.totalorder %s15, 0
    %p223 = por %p221, %p222
    %p224 = scmp.ne.s32.totalorder %s213, %s216
    %p225 = scmp.eq.s32.totalorder %s20, 2
    %p226 = por %p224, %p225
    %p227 = scmp.ne.s32.totalorder %s216, %s217
    %p228 = scmp.eq.s32.totalorder %s20, 0
    %p229 = por %p227, %p228
    %p230 = scmp.ne.s32.totalorder %s216, %s217
    %p231 = scmp.eq.s32.totalorder %s21, 2
    %p232 = por %p230, %p231
    %p234 = scmp.ne.s32.totalorder %s217, %s233
    %p235 = scmp.eq.s32.totalorder %s21, 0
    %p236 = por %p234, %p235
    %p237 = scmp.le.s32.totalorder 1, %s15
    %p238 = scmp.lt.s32.totalorder %s15, 4
    %p239 = pnand %p237, %p238
    %p240 = pneg %p239
    // Predicated region
    $region9: #{decode_block_forward.3} parent=5 // pred_check
      _
    $region10: #{decode_block_forward.3} parent=5 // pred_check_branch
      %242 = sbr.rel (%p239) target = $region12
    $region11: #{decode_block_forward.3} parent=5 // pred_region
      %s243 = ssub.s32 %s15, 1
      // Predicated region
      $region13: #{decode_block_forward.3} parent=11 // pred_check
        %p244 = pneg %p62
      $region14: #{decode_block_forward.3} parent=11 // pred_check_branch
        %246 = sbr.rel (%p244) target = $region16
      $region15: #{decode_block_forward.3} parent=11 // pred_region
        _
      $region16: #{decode_block_forward.3} parent=11 // pred_fallthru
        _
      // Predicated region
      $region17: #{decode_block_forward.3} parent=11 // pred_check
        %p247 = pneg %p83
      $region18: #{decode_block_forward.3} parent=11 // pred_check_branch
        %249 = sbr.rel (%p247) target = $region20
      $region19: #{decode_block_forward.3} parent=11 // pred_region
        _
      $region20: #{decode_block_forward.3} parent=11 // pred_fallthru
        _
      // Predicated region
      $region21: #{decode_block_forward.3} parent=11 // pred_check
        %p250 = pneg %p156
      $region22: #{decode_block_forward.3} parent=11 // pred_check_branch
        %252 = sbr.rel (%p250) target = $region24
      $region23: #{decode_block_forward.3} parent=11 // pred_region
        _
      $region24: #{decode_block_forward.3} parent=11 // pred_fallthru
        _
      // Predicated region
      $region25: #{decode_block_forward.3} parent=11 // pred_check
        %p253 = pneg %p177
      $region26: #{decode_block_forward.3} parent=11 // pred_check_branch
        %255 = sbr.rel (%p253) target = $region28
      $region27: #{decode_block_forward.3} parent=11 // pred_region
        _
      $region28: #{decode_block_forward.3} parent=11 // pred_fallthru
        _
    $region12: #{decode_block_forward.3} parent=5 // pred_fallthru
      _
    %p256 = scmp.lt.s32.totalorder %s15, 3
    // Predicated region
    $region29: #{decode_block_forward.3} parent=5 // pred_check
      %p257 = pneg %p256
    $region30: #{decode_block_forward.3} parent=5 // pred_check_branch
      %259 = sbr.rel (%p257) target = $region32
    $region31: #{decode_block_forward.3} parent=5 // pred_region
      // Predicated region
      $region33: #{decode_block_forward.3} parent=31 // pred_check
        %p260 = pneg %p35
      $region34: #{decode_block_forward.3} parent=31 // pred_check_branch
        %262 = sbr.rel (%p260) target = $region36
      $region35: #{decode_block_forward.3} parent=31 // pred_region
        %s263 = smul.u32 32, %s15
        %p264 = scmp.lt.s32.totalorder %s263, 95
        %s265 = scalar_select %p264, %s263, 95
        %s266 = smul.addr %s265, 8
        %s267 = scalar_lea.vmem %s0, %s266
        %s268 = smul.u32 32, %s15
      $region36: #{decode_block_forward.3} parent=31 // pred_fallthru
        _
      // Predicated region
      $region37: #{decode_block_forward.3} parent=31 // pred_check
        %p269 = pneg %p103
      $region38: #{decode_block_forward.3} parent=31 // pred_check_branch
        %271 = sbr.rel (%p269) target = $region40
      $region39: #{decode_block_forward.3} parent=31 // pred_region
        %s272 = smul.u32 32, %s15
        %p273 = scmp.lt.s32.totalorder %s272, 95
        %s274 = scalar_select %p273, %s272, 95
        %s275 = smul.addr %s274, 8
        %s276 = scalar_lea.vmem %s3, %s275
        %s277 = smul.u32 32, %s15
      $region40: #{decode_block_forward.3} parent=31 // pred_fallthru
        _
      // Predicated region
      $region41: #{decode_block_forward.3} parent=31 // pred_check
        %p278 = pneg %p129
      $region42: #{decode_block_forward.3} parent=31 // pred_check_branch
        %280 = sbr.rel (%p278) target = $region44
      $region43: #{decode_block_forward.3} parent=31 // pred_region
        %s281 = smul.u32 32, %s15
        %p282 = scmp.lt.s32.totalorder %s281, 95
        %s283 = scalar_select %p282, %s281, 95
        %s284 = smul.addr %s283, 8
        %s285 = scalar_lea.vmem %s4, %s284
        %s286 = smul.u32 32, %s15
      $region44: #{decode_block_forward.3} parent=31 // pred_fallthru
        _
    $region32: #{decode_block_forward.3} parent=5 // pred_fallthru
      _
    %p287 = scmp.le.s32.totalorder 1, %s15
    %p288 = scmp.lt.s32.totalorder %s15, 4
    %p289 = pnand %p287, %p288
    %p290 = pneg %p289
    // Predicated region
    $region45: #{decode_block_forward.3} parent=5 // pred_check
      _
    $region46: #{decode_block_forward.3} parent=5 // pred_check_branch
      %292 = sbr.rel (%p289) target = $region48
    $region47: #{decode_block_forward.3} parent=5 // pred_region
      %s293 = ssub.s32 %s15, 1
      %s294 = smul.u32 32, %s20
      %p295 = scmp.lt.s32.totalorder %s294, 95
      %s296 = scalar_select %p295, %s294, 95
      %s297 = smul.addr %s296, 8
      %s298 = scalar_lea.vmem %s0, %s297
      %p299 = pneg %p41
      %p300 = pneg %p38
      %p301 = pneg %p62
      %p302 = pneg %p59
      %p303 = pneg %p83
      %p304 = pneg %p80
      %s305 = smul.u32 32, %s20
      %p306 = scmp.lt.s32.totalorder %s305, 95
      %s307 = scalar_select %p306, %s305, 95
      %s308 = smul.addr %s307, 8
      %s309 = scalar_lea.vmem %s3, %s308
      %p310 = pneg %p109
      %p311 = pneg %p106
      %s312 = smul.u32 32, %s20
      %p313 = scmp.lt.s32.totalorder %s312, 95
      %s314 = scalar_select %p313, %s312, 95
      %s315 = smul.addr %s314, 8
      %s316 = scalar_lea.vmem %s4, %s315
      %p317 = pneg %p135
      %p318 = pneg %p132
      %p319 = pneg %p156
      %p320 = pneg %p153
      %p321 = pneg %p177
      %p322 = pneg %p174
      %p323 = pneg %p203
      %p324 = pneg %p200
      %s325 = smul.u32 32, %s20
      %p326 = scmp.lt.s32.totalorder %s325, 95
      %s327 = scalar_select %p326, %s325, 95
      %s328 = smul.addr %s327, 8
      %s329 = scalar_lea.vmem %s7, %s328
      %p330 = pneg %p229
      %p331 = pneg %p226
      %p332 = scmp.lt.s32.totalorder %s20, 2
      %s333 = scalar_select %p332, %s20, 2
      %s334 = smul.addr %s333, 2
      %s335 = scalar_lea.vmem %s8, %s334
      %s336 = smul.u32 32, %s20
      %p337 = scmp.lt.s32.totalorder %s336, 95
      %s338 = scalar_select %p337, %s336, 95
      %s339 = smul.addr %s338, 8
      %s340 = scalar_lea.vmem %s0, %s339
      %s341 = smul.u32 32, %s20
      %s342 = smul.u32 32, %s20
      %p343 = scmp.lt.s32.totalorder %s342, 95
      %s344 = scalar_select %p343, %s342, 95
      %s345 = smul.addr %s344, 8
      %s346 = scalar_lea.vmem %s3, %s345
      %s347 = smul.u32 32, %s20
      %s348 = smul.u32 32, %s20
      %p349 = scmp.lt.s32.totalorder %s348, 95
      %s350 = scalar_select %p349, %s348, 95
      %s351 = smul.addr %s350, 8
      %s352 = scalar_lea.vmem %s4, %s351
      %s353 = smul.u32 32, %s20
      %s354 = smul.u32 32, %s20
      %p355 = scmp.lt.s32.totalorder %s354, 95
      %s356 = scalar_select %p355, %s354, 95
      %s357 = smul.addr %s356, 8
      %s358 = scalar_lea.vmem %s7, %s357
      %s359 = smul.u32 32, %s20
      %p360 = scmp.lt.s32.totalorder %s20, 2
      %s361 = scalar_select %p360, %s20, 2
      %s362 = smul.addr %s361, 2
      %s363 = scalar_lea.vmem %s8, %s362
      %v364 = vld [vmem:[%s340] sm:$0xff]
      %v365 = vld [vmem:[%s340 + $0x8] sm:$0xff]
      %v366 = vld [vmem:[%s340 + $0x10] sm:$0xff]
      %v367 = vld [vmem:[%s340 + $0x18] sm:$0xff]
      %v368 = vld [vmem:[%s340 + $0x20] sm:$0xff]
      %v369 = vld [vmem:[%s340 + $0x28] sm:$0xff]
      %v370 = vld [vmem:[%s340 + $0x30] sm:$0xff]
      %v371 = vld [vmem:[%s340 + $0x38] sm:$0xff]
      %v372 = vld [vmem:[%s340 + $0x40] sm:$0xff]
      %v373 = vld [vmem:[%s340 + $0x48] sm:$0xff]
      %v374 = vld [vmem:[%s340 + $0x50] sm:$0xff]
      %v375 = vld [vmem:[%s340 + $0x58] sm:$0xff]
      %v376 = vld [vmem:[%s340 + $0x60] sm:$0xff]
      %v377 = vld [vmem:[%s340 + $0x68] sm:$0xff]
      %v378 = vld [vmem:[%s340 + $0x70] sm:$0xff]
      %v379 = vld [vmem:[%s340 + $0x78] sm:$0xff]
      %v380 = vld [vmem:[%s340 + $0x80] sm:$0xff]
      %v381 = vld [vmem:[%s340 + $0x88] sm:$0xff]
      %v382 = vld [vmem:[%s340 + $0x90] sm:$0xff]
      %v383 = vld [vmem:[%s340 + $0x98] sm:$0xff]
      %v384 = vld [vmem:[%s340 + $0xa0] sm:$0xff]
      %v385 = vld [vmem:[%s340 + $0xa8] sm:$0xff]
      %v386 = vld [vmem:[%s340 + $0xb0] sm:$0xff]
      %v387 = vld [vmem:[%s340 + $0xb8] sm:$0xff]
      %v388 = vld [vmem:[%s340 + $0xc0] sm:$0xff]
      %v389 = vld [vmem:[%s340 + $0xc8] sm:$0xff]
      %v390 = vld [vmem:[%s340 + $0xd0] sm:$0xff]
      %v391 = vld [vmem:[%s340 + $0xd8] sm:$0xff]
      %v392 = vld [vmem:[%s340 + $0xe0] sm:$0xff]
      %v393 = vld [vmem:[%s340 + $0xe8] sm:$0xff]
      %v394 = vld [vmem:[%s340 + $0xf0] sm:$0xff]
      %v395 = vld [vmem:[%s340 + $0xf8] sm:$0xff]
      %v396 = vld [vmem:[%s1] sm:$0xff]
      %v397 = vld [vmem:[%s1 + $0x8] sm:$0xff]
      %v398 = vld [vmem:[%s2] sm:$0x1]
      %v400 = vlaneseq
      %v401 = vshrl.u32 %v400, 7
      %v402 = vsub.s32 0, %v401
      %v403 = vrot.slane %v398, %v402
      %vm405 = vcmask 130048
      %v407 = vsel %vm405, %v364, 0
      %v410 = vsel %vm405, %v365, 0
      %v413 = vsel %vm405, %v366, 0
      %v416 = vsel %vm405, %v367, 0
      %v419 = vsel %vm405, %v368, 0
      %v422 = vsel %vm405, %v369, 0
      %v425 = vsel %vm405, %v370, 0
      %v428 = vsel %vm405, %v371, 0
      %v431 = vsel %vm405, %v372, 0
      %v434 = vsel %vm405, %v373, 0
      %v437 = vsel %vm405, %v374, 0
      %v440 = vsel %vm405, %v375, 0
      %v443 = vsel %vm405, %v376, 0
      %v446 = vsel %vm405, %v377, 0
      %v449 = vsel %vm405, %v378, 0
      %v452 = vsel %vm405, %v379, 0
      %v455 = vsel %vm405, %v380, 0
      %v458 = vsel %vm405, %v381, 0
      %v461 = vsel %vm405, %v382, 0
      %v464 = vsel %vm405, %v383, 0
      %v467 = vsel %vm405, %v384, 0
      %v470 = vsel %vm405, %v385, 0
      %v473 = vsel %vm405, %v386, 0
      %v476 = vsel %vm405, %v387, 0
      %v479 = vsel %vm405, %v388, 0
      %v482 = vsel %vm405, %v389, 0
      %v485 = vsel %vm405, %v390, 0
      %v488 = vsel %vm405, %v391, 0
      %v491 = vsel %vm405, %v392, 0
      %v494 = vsel %vm405, %v393, 0
      %v497 = vsel %vm405, %v394, 0
      %v500 = vsel %vm405, %v395, 0
      %502 = vmatprep.subr.mxu0 0.0
      %503 = vmatpush1.msra.mxu0 0.0
      %504 = vmatprep.subr.mxu0 0.0
      %505 = vmatpush1.msra.mxu0 0.0
      %506 = vmatprep.subr.mxu0 0.0
      %507 = vmatpush1.msra.mxu0 0.0
      %508 = vmatprep.subr.mxu0 0.0
      %509 = vmatpush1.msra.mxu0 0.0
      %510 = vmatprep.subr.mxu0 0.0
      %511 = vmatpush1.msra.mxu0 0.0
      %512 = vmatprep.subr.mxu0 0.0
      %513 = vmatpush1.msra.mxu0 0.0
      %514 = vmatprep.subr.mxu0 0.0
      %515 = vmatpush1.msra.mxu0 0.0
      %516 = vmatprep.subr.mxu0 0.0
      %517 = vmatpush1.msra.mxu0 0.0
      %518 = vmatprep.subr.mxu0 0.0
      %519 = vmatpush1.msra.mxu0 0.0
      %520 = vmatprep.subr.mxu0 0.0
      %521 = vmatpush1.msra.mxu0 0.0
      %522 = vmatprep.subr.mxu0 0.0
      %523 = vmatpush1.msra.mxu0 0.0
      %524 = vmatprep.subr.mxu0 0.0
      %525 = vmatpush1.msra.mxu0 0.0
      %526 = vmatprep.subr.mxu0 0.0
      %527 = vmatpush1.msra.mxu0 0.0
      %528 = vmatprep.subr.mxu0 0.0
      %529 = vmatpush1.msra.mxu0 0.0
      %530 = vmatprep.subr.mxu0 0.0
      %531 = vmatpush1.msra.mxu0 %v397
      %532 = vmatprep.subr.mxu0 0.0
      %533 = vmatpush1.msra.mxu0 %v396
      %534 = vmatprep.subr.mxu0 0.0
      %535 = vmatpush2.msra.mxu0 0.0
      %536 = vmatprep.subr.mxu0 0.0
      %537 = vmatpush2.msra.mxu0 0.0
      %538 = vmatprep.subr.mxu0 0.0
      %539 = vmatpush2.msra.mxu0 0.0
      %540 = vmatprep.subr.mxu0 0.0
      %541 = vmatpush2.msra.mxu0 0.0
      %542 = vmatprep.subr.mxu0 0.0
      %543 = vmatpush2.msra.mxu0 0.0
      %544 = vmatprep.subr.mxu0 0.0
      %545 = vmatpush2.msra.mxu0 0.0
      %546 = vmatprep.subr.mxu0 0.0
      %547 = vmatpush2.msra.mxu0 0.0
      %548 = vmatprep.subr.mxu0 0.0
      %549 = vmatpush2.msra.mxu0 0.0
      %550 = vmatprep.subr.mxu0 0.0
      %551 = vmatpush2.msra.mxu0 0.0
      %552 = vmatprep.subr.mxu0 0.0
      %553 = vmatpush2.msra.mxu0 0.0
      %554 = vmatprep.subr.mxu0 0.0
      %555 = vmatpush2.msra.mxu0 0.0
      %556 = vmatprep.subr.mxu0 0.0
      %557 = vmatpush2.msra.mxu0 0.0
      %558 = vmatprep.subr.mxu0 0.0
      %559 = vmatpush2.msra.mxu0 0.0
      %560 = vmatprep.subr.mxu0 0.0
      %561 = vmatpush2.msra.mxu0 0.0
      %562 = vmatprep.subr.mxu0 0.0
      %563 = vmatpush2.msra.mxu0 0.0
      %564 = vmatprep.subr.mxu0 0.0
      %565 = vmatpush2.msra.mxu0 0.0
      %566 = vmatprep.mubr.f32.mxu0 0.0
      %567 = vmatmul.mubr.f32.gmra.mxu0 %v407
      %v568 = vpop.f32.mrf.mxu0
      %v569 = vadd.f32 %v403, %v568
      %v570 = vpop.f32.mrf.mxu0
      %571 = vmatprep.mubr.f32.mxu0 0.0
      %572 = vmatmul.mubr.f32.gmra.mxu0 %v410
      %v573 = vpop.f32.mrf.mxu0
      %v574 = vadd.f32 %v403, %v573
      %v575 = vpop.f32.mrf.mxu0
      %576 = vmatprep.mubr.f32.mxu0 0.0
      %577 = vmatmul.mubr.f32.gmra.mxu0 %v413
      %v578 = vpop.f32.mrf.mxu0
      %v579 = vadd.f32 %v403, %v578
      %v580 = vpop.f32.mrf.mxu0
      %581 = vmatprep.mubr.f32.mxu0 0.0
      %582 = vmatmul.mubr.f32.gmra.mxu0 %v416
      %v583 = vpop.f32.mrf.mxu0
      %v584 = vadd.f32 %v403, %v583
      %v585 = vpop.f32.mrf.mxu0
      %586 = vmatprep.mubr.f32.mxu0 0.0
      %587 = vmatmul.mubr.f32.gmra.mxu0 %v419
      %v588 = vpop.f32.mrf.mxu0
      %v589 = vadd.f32 %v403, %v588
      %v590 = vpop.f32.mrf.mxu0
      %591 = vmatprep.mubr.f32.mxu0 0.0
      %592 = vmatmul.mubr.f32.gmra.mxu0 %v422
      %v593 = vpop.f32.mrf.mxu0
      %v594 = vadd.f32 %v403, %v593
      %v595 = vpop.f32.mrf.mxu0
      %596 = vmatprep.mubr.f32.mxu0 0.0
      %597 = vmatmul.mubr.f32.gmra.mxu0 %v425
      %v598 = vpop.f32.mrf.mxu0
      %v599 = vadd.f32 %v403, %v598
      %v600 = vpop.f32.mrf.mxu0
      %601 = vmatprep.mubr.f32.mxu0 0.0
      %602 = vmatmul.mubr.f32.gmra.mxu0 %v428
      %v603 = vpop.f32.mrf.mxu0
      %v604 = vadd.f32 %v403, %v603
      %v605 = vpop.f32.mrf.mxu0
      %606 = vmatprep.mubr.f32.mxu0 0.0
      %607 = vmatmul.mubr.f32.gmra.mxu0 %v431
      %v608 = vpop.f32.mrf.mxu0
      %v609 = vadd.f32 %v403, %v608
      %v610 = vpop.f32.mrf.mxu0
      %611 = vmatprep.mubr.f32.mxu0 0.0
      %612 = vmatmul.mubr.f32.gmra.mxu0 %v434
      %v613 = vpop.f32.mrf.mxu0
      %v614 = vadd.f32 %v403, %v613
      %v615 = vpop.f32.mrf.mxu0
      %616 = vmatprep.mubr.f32.mxu0 0.0
      %617 = vmatmul.mubr.f32.gmra.mxu0 %v437
      %v618 = vpop.f32.mrf.mxu0
      %v619 = vadd.f32 %v403, %v618
      %v620 = vpop.f32.mrf.mxu0
      %621 = vmatprep.mubr.f32.mxu0 0.0
      %622 = vmatmul.mubr.f32.gmra.mxu0 %v440
      %v623 = vpop.f32.mrf.mxu0
      %v624 = vadd.f32 %v403, %v623
      %v625 = vpop.f32.mrf.mxu0
      %626 = vmatprep.mubr.f32.mxu0 0.0
      %627 = vmatmul.mubr.f32.gmra.mxu0 %v443
      %v628 = vpop.f32.mrf.mxu0
      %v629 = vadd.f32 %v403, %v628
      %v630 = vpop.f32.mrf.mxu0
      %631 = vmatprep.mubr.f32.mxu0 0.0
      %632 = vmatmul.mubr.f32.gmra.mxu0 %v446
      %v633 = vpop.f32.mrf.mxu0
      %v634 = vadd.f32 %v403, %v633
      %v635 = vpop.f32.mrf.mxu0
      %636 = vmatprep.mubr.f32.mxu0 0.0
      %637 = vmatmul.mubr.f32.gmra.mxu0 %v449
      %v638 = vpop.f32.mrf.mxu0
      %v639 = vadd.f32 %v403, %v638
      %v640 = vpop.f32.mrf.mxu0
      %641 = vmatprep.mubr.f32.mxu0 0.0
      %642 = vmatmul.mubr.f32.gmra.mxu0 %v452
      %v643 = vpop.f32.mrf.mxu0
      %v644 = vadd.f32 %v403, %v643
      %v645 = vpop.f32.mrf.mxu0
      %646 = vmatprep.mubr.f32.mxu0 0.0
      %647 = vmatmul.mubr.f32.gmra.mxu0 %v455
      %v648 = vpop.f32.mrf.mxu0
      %v649 = vadd.f32 %v403, %v648
      %v650 = vpop.f32.mrf.mxu0
      %651 = vmatprep.mubr.f32.mxu0 0.0
      %652 = vmatmul.mubr.f32.gmra.mxu0 %v458
      %v653 = vpop.f32.mrf.mxu0
      %v654 = vadd.f32 %v403, %v653
      %v655 = vpop.f32.mrf.mxu0
      %656 = vmatprep.mubr.f32.mxu0 0.0
      %657 = vmatmul.mubr.f32.gmra.mxu0 %v461
      %v658 = vpop.f32.mrf.mxu0
      %v659 = vadd.f32 %v403, %v658
      %v660 = vpop.f32.mrf.mxu0
      %661 = vmatprep.mubr.f32.mxu0 0.0
      %662 = vmatmul.mubr.f32.gmra.mxu0 %v464
      %v663 = vpop.f32.mrf.mxu0
      %v664 = vadd.f32 %v403, %v663
      %v665 = vpop.f32.mrf.mxu0
      %666 = vmatprep.mubr.f32.mxu0 0.0
      %667 = vmatmul.mubr.f32.gmra.mxu0 %v467
      %v668 = vpop.f32.mrf.mxu0
      %v669 = vadd.f32 %v403, %v668
      %v670 = vpop.f32.mrf.mxu0
      %671 = vmatprep.mubr.f32.mxu0 0.0
      %672 = vmatmul.mubr.f32.gmra.mxu0 %v470
      %v673 = vpop.f32.mrf.mxu0
      %v674 = vadd.f32 %v403, %v673
      %v675 = vpop.f32.mrf.mxu0
      %676 = vmatprep.mubr.f32.mxu0 0.0
      %677 = vmatmul.mubr.f32.gmra.mxu0 %v473
      %v678 = vpop.f32.mrf.mxu0
      %v679 = vadd.f32 %v403, %v678
      %v680 = vpop.f32.mrf.mxu0
      %681 = vmatprep.mubr.f32.mxu0 0.0
      %682 = vmatmul.mubr.f32.gmra.mxu0 %v476
      %v683 = vpop.f32.mrf.mxu0
      %v684 = vadd.f32 %v403, %v683
      %v685 = vpop.f32.mrf.mxu0
      %686 = vmatprep.mubr.f32.mxu0 0.0
      %687 = vmatmul.mubr.f32.gmra.mxu0 %v479
      %v688 = vpop.f32.mrf.mxu0
      %v689 = vadd.f32 %v403, %v688
      %v690 = vpop.f32.mrf.mxu0
      %691 = vmatprep.mubr.f32.mxu0 0.0
      %692 = vmatmul.mubr.f32.gmra.mxu0 %v482
      %v693 = vpop.f32.mrf.mxu0
      %v694 = vadd.f32 %v403, %v693
      %v695 = vpop.f32.mrf.mxu0
      %696 = vmatprep.mubr.f32.mxu0 0.0
      %697 = vmatmul.mubr.f32.gmra.mxu0 %v485
      %v698 = vpop.f32.mrf.mxu0
      %v699 = vadd.f32 %v403, %v698
      %v700 = vpop.f32.mrf.mxu0
      %701 = vmatprep.mubr.f32.mxu0 0.0
      %702 = vmatmul.mubr.f32.gmra.mxu0 %v488
      %v703 = vpop.f32.mrf.mxu0
      %v704 = vadd.f32 %v403, %v703
      %v705 = vpop.f32.mrf.mxu0
      %706 = vmatprep.mubr.f32.mxu0 0.0
      %707 = vmatmul.mubr.f32.gmra.mxu0 %v491
      %v708 = vpop.f32.mrf.mxu0
      %v709 = vadd.f32 %v403, %v708
      %v710 = vpop.f32.mrf.mxu0
      %711 = vmatprep.mubr.f32.mxu0 0.0
      %712 = vmatmul.mubr.f32.gmra.mxu0 %v494
      %v713 = vpop.f32.mrf.mxu0
      %v714 = vadd.f32 %v403, %v713
      %v715 = vpop.f32.mrf.mxu0
      %716 = vmatprep.mubr.f32.mxu0 0.0
      %717 = vmatmul.mubr.f32.gmra.mxu0 %v497
      %v718 = vpop.f32.mrf.mxu0
      %v719 = vadd.f32 %v403, %v718
      %v720 = vpop.f32.mrf.mxu0
      %721 = vmatprep.mubr.f32.mxu0 0.0
      %722 = vmatmul.mubr.f32.gmra.mxu0 %v500
      %v723 = vpop.f32.mrf.mxu0
      %v724 = vadd.f32 %v403, %v723
      %v725 = vpop.f32.mrf.mxu0
      %726 = vdwg.mxu0
      %vm727 = vcmask 261120
      %728 = vst.msk [vmem:[%s358] sm:$0xff] %vm727, %v569
      %729 = vst.msk [vmem:[%s358 + $0x8] sm:$0xff] %vm727, %v574
      %730 = vst.msk [vmem:[%s358 + $0x10] sm:$0xff] %vm727, %v579
      %731 = vst.msk [vmem:[%s358 + $0x18] sm:$0xff] %vm727, %v584
      %732 = vst.msk [vmem:[%s358 + $0x20] sm:$0xff] %vm727, %v589
      %733 = vst.msk [vmem:[%s358 + $0x28] sm:$0xff] %vm727, %v594
      %734 = vst.msk [vmem:[%s358 + $0x30] sm:$0xff] %vm727, %v599
      %735 = vst.msk [vmem:[%s358 + $0x38] sm:$0xff] %vm727, %v604
      %736 = vst.msk [vmem:[%s358 + $0x40] sm:$0xff] %vm727, %v609
      %737 = vst.msk [vmem:[%s358 + $0x48] sm:$0xff] %vm727, %v614
      %738 = vst.msk [vmem:[%s358 + $0x50] sm:$0xff] %vm727, %v619
      %739 = vst.msk [vmem:[%s358 + $0x58] sm:$0xff] %vm727, %v624
      %740 = vst.msk [vmem:[%s358 + $0x60] sm:$0xff] %vm727, %v629
      %741 = vst.msk [vmem:[%s358 + $0x68] sm:$0xff] %vm727, %v634
      %742 = vst.msk [vmem:[%s358 + $0x70] sm:$0xff] %vm727, %v639
      %743 = vst.msk [vmem:[%s358 + $0x78] sm:$0xff] %vm727, %v644
      %744 = vst.msk [vmem:[%s358 + $0x80] sm:$0xff] %vm727, %v649
      %745 = vst.msk [vmem:[%s358 + $0x88] sm:$0xff] %vm727, %v654
      %746 = vst.msk [vmem:[%s358 + $0x90] sm:$0xff] %vm727, %v659
      %747 = vst.msk [vmem:[%s358 + $0x98] sm:$0xff] %vm727, %v664
      %748 = vst.msk [vmem:[%s358 + $0xa0] sm:$0xff] %vm727, %v669
      %749 = vst.msk [vmem:[%s358 + $0xa8] sm:$0xff] %vm727, %v674
      %750 = vst.msk [vmem:[%s358 + $0xb0] sm:$0xff] %vm727, %v679
      %751 = vst.msk [vmem:[%s358 + $0xb8] sm:$0xff] %vm727, %v684
      %752 = vst.msk [vmem:[%s358 + $0xc0] sm:$0xff] %vm727, %v689
      %753 = vst.msk [vmem:[%s358 + $0xc8] sm:$0xff] %vm727, %v694
      %754 = vst.msk [vmem:[%s358 + $0xd0] sm:$0xff] %vm727, %v699
      %755 = vst.msk [vmem:[%s358 + $0xd8] sm:$0xff] %vm727, %v704
      %756 = vst.msk [vmem:[%s358 + $0xe0] sm:$0xff] %vm727, %v709
      %757 = vst.msk [vmem:[%s358 + $0xe8] sm:$0xff] %vm727, %v714
      %758 = vst.msk [vmem:[%s358 + $0xf0] sm:$0xff] %vm727, %v719
      %759 = vst.msk [vmem:[%s358 + $0xf8] sm:$0xff] %vm727, %v724
      %v760 = vld [vmem:[%s346] sm:$0xff]
      %v761 = vld [vmem:[%s346 + $0x8] sm:$0xff]
      %v762 = vld [vmem:[%s346 + $0x10] sm:$0xff]
      %v763 = vld [vmem:[%s346 + $0x18] sm:$0xff]
      %v764 = vld [vmem:[%s346 + $0x20] sm:$0xff]
      %v765 = vld [vmem:[%s346 + $0x28] sm:$0xff]
      %v766 = vld [vmem:[%s346 + $0x30] sm:$0xff]
      %v767 = vld [vmem:[%s346 + $0x38] sm:$0xff]
      %v768 = vld [vmem:[%s346 + $0x40] sm:$0xff]
      %v769 = vld [vmem:[%s346 + $0x48] sm:$0xff]
      %v770 = vld [vmem:[%s346 + $0x50] sm:$0xff]
      %v771 = vld [vmem:[%s346 + $0x58] sm:$0xff]
      %v772 = vld [vmem:[%s346 + $0x60] sm:$0xff]
      %v773 = vld [vmem:[%s346 + $0x68] sm:$0xff]
      %v774 = vld [vmem:[%s346 + $0x70] sm:$0xff]
      %v775 = vld [vmem:[%s346 + $0x78] sm:$0xff]
      %v776 = vld [vmem:[%s346 + $0x80] sm:$0xff]
      %v777 = vld [vmem:[%s346 + $0x88] sm:$0xff]
      %v778 = vld [vmem:[%s346 + $0x90] sm:$0xff]
      %v779 = vld [vmem:[%s346 + $0x98] sm:$0xff]
      %v780 = vld [vmem:[%s346 + $0xa0] sm:$0xff]
      %v781 = vld [vmem:[%s346 + $0xa8] sm:$0xff]
      %v782 = vld [vmem:[%s346 + $0xb0] sm:$0xff]
      %v783 = vld [vmem:[%s346 + $0xb8] sm:$0xff]
      %v784 = vld [vmem:[%s346 + $0xc0] sm:$0xff]
      %v785 = vld [vmem:[%s346 + $0xc8] sm:$0xff]
      %v786 = vld [vmem:[%s346 + $0xd0] sm:$0xff]
      %v787 = vld [vmem:[%s346 + $0xd8] sm:$0xff]
      %v788 = vld [vmem:[%s346 + $0xe0] sm:$0xff]
      %v789 = vld [vmem:[%s346 + $0xe8] sm:$0xff]
      %v790 = vld [vmem:[%s346 + $0xf0] sm:$0xff]
      %v791 = vld [vmem:[%s346 + $0xf8] sm:$0xff]
      %v792 = vld [vmem:[%s5] sm:$0x1]
      %793 = vset.pattern.permute.xlu0 0
      %794 = vperm.xlu0 %793, %v760
      %v795 = vpop.permute.xlu0 %794
      %796 = vset.pattern.permute.xlu0 0
      %797 = vperm.xlu0 %796, %v761
      %v798 = vpop.permute.xlu0 %797
      %799 = vset.pattern.permute.xlu0 0
      %800 = vperm.xlu0 %799, %v762
      %v801 = vpop.permute.xlu0 %800
      %802 = vset.pattern.permute.xlu0 0
      %803 = vperm.xlu0 %802, %v763
      %v804 = vpop.permute.xlu0 %803
      %805 = vset.pattern.permute.xlu0 0
      %806 = vperm.xlu0 %805, %v764
      %v807 = vpop.permute.xlu0 %806
      %808 = vset.pattern.permute.xlu0 0
      %809 = vperm.xlu0 %808, %v765
      %v810 = vpop.permute.xlu0 %809
      %811 = vset.pattern.permute.xlu0 0
      %812 = vperm.xlu0 %811, %v766
      %v813 = vpop.permute.xlu0 %812
      %814 = vset.pattern.permute.xlu0 0
      %815 = vperm.xlu0 %814, %v767
      %v816 = vpop.permute.xlu0 %815
      %817 = vset.pattern.permute.xlu0 0
      %818 = vperm.xlu0 %817, %v768
      %v819 = vpop.permute.xlu0 %818
      %820 = vset.pattern.permute.xlu0 0
      %821 = vperm.xlu0 %820, %v769
      %v822 = vpop.permute.xlu0 %821
      %823 = vset.pattern.permute.xlu0 0
      %824 = vperm.xlu0 %823, %v770
      %v825 = vpop.permute.xlu0 %824
      %826 = vset.pattern.permute.xlu0 0
      %827 = vperm.xlu0 %826, %v771
      %v828 = vpop.permute.xlu0 %827
      %829 = vset.pattern.permute.xlu0 0
      %830 = vperm.xlu0 %829, %v772
      %v831 = vpop.permute.xlu0 %830
      %832 = vset.pattern.permute.xlu0 0
      %833 = vperm.xlu0 %832, %v773
      %v834 = vpop.permute.xlu0 %833
      %835 = vset.pattern.permute.xlu0 0
      %836 = vperm.xlu0 %835, %v774
      %v837 = vpop.permute.xlu0 %836
      %838 = vset.pattern.permute.xlu0 0
      %839 = vperm.xlu0 %838, %v775
      %v840 = vpop.permute.xlu0 %839
      %841 = vset.pattern.permute.xlu0 0
      %842 = vperm.xlu0 %841, %v776
      %v843 = vpop.permute.xlu0 %842
      %844 = vset.pattern.permute.xlu0 0
      %845 = vperm.xlu0 %844, %v777
      %v846 = vpop.permute.xlu0 %845
      %847 = vset.pattern.permute.xlu0 0
      %848 = vperm.xlu0 %847, %v778
      %v849 = vpop.permute.xlu0 %848
      %850 = vset.pattern.permute.xlu0 0
      %851 = vperm.xlu0 %850, %v779
      %v852 = vpop.permute.xlu0 %851
      %853 = vset.pattern.permute.xlu0 0
      %854 = vperm.xlu0 %853, %v780
      %v855 = vpop.permute.xlu0 %854
      %856 = vset.pattern.permute.xlu0 0
      %857 = vperm.xlu0 %856, %v781
      %v858 = vpop.permute.xlu0 %857
      %859 = vset.pattern.permute.xlu0 0
      %860 = vperm.xlu0 %859, %v782
      %v861 = vpop.permute.xlu0 %860
      %862 = vset.pattern.permute.xlu0 0
      %863 = vperm.xlu0 %862, %v783
      %v864 = vpop.permute.xlu0 %863
      %865 = vset.pattern.permute.xlu0 0
      %866 = vperm.xlu0 %865, %v784
      %v867 = vpop.permute.xlu0 %866
      %868 = vset.pattern.permute.xlu0 0
      %869 = vperm.xlu0 %868, %v785
      %v870 = vpop.permute.xlu0 %869
      %871 = vset.pattern.permute.xlu0 0
      %872 = vperm.xlu0 %871, %v786
      %v873 = vpop.permute.xlu0 %872
      %874 = vset.pattern.permute.xlu0 0
      %875 = vperm.xlu0 %874, %v787
      %v876 = vpop.permute.xlu0 %875
      %877 = vset.pattern.permute.xlu0 0
      %878 = vperm.xlu0 %877, %v788
      %v879 = vpop.permute.xlu0 %878
      %880 = vset.pattern.permute.xlu0 0
      %881 = vperm.xlu0 %880, %v789
      %v882 = vpop.permute.xlu0 %881
      %883 = vset.pattern.permute.xlu0 0
      %884 = vperm.xlu0 %883, %v790
      %v885 = vpop.permute.xlu0 %884
      %886 = vset.pattern.permute.xlu0 0
      %887 = vperm.xlu0 %886, %v791
      %v888 = vpop.permute.xlu0 %887
      %v889 = vlaneseq
      %v890 = vshrl.u32 %v889, 7
      %v891 = vsub.s32 0, %v890
      %v892 = vrot.slane %v792, %v891
      %v893 = vadd.s32 %v795, %v892
      %v894 = vadd.s32 %v798, %v892
      %v895 = vadd.s32 %v801, %v892
      %v896 = vadd.s32 %v804, %v892
      %v897 = vadd.s32 %v807, %v892
      %v898 = vadd.s32 %v810, %v892
      %v899 = vadd.s32 %v813, %v892
      %v900 = vadd.s32 %v816, %v892
      %v901 = vadd.s32 %v819, %v892
      %v902 = vadd.s32 %v822, %v892
      %v903 = vadd.s32 %v825, %v892
      %v904 = vadd.s32 %v828, %v892
      %v905 = vadd.s32 %v831, %v892
      %v906 = vadd.s32 %v834, %v892
      %v907 = vadd.s32 %v837, %v892
      %v908 = vadd.s32 %v840, %v892
      %v909 = vadd.s32 %v843, %v892
      %v910 = vadd.s32 %v846, %v892
      %v911 = vadd.s32 %v849, %v892
      %v912 = vadd.s32 %v852, %v892
      %v913 = vadd.s32 %v855, %v892
      %v914 = vadd.s32 %v858, %v892
      %v915 = vadd.s32 %v861, %v892
      %v916 = vadd.s32 %v864, %v892
      %v917 = vadd.s32 %v867, %v892
      %v918 = vadd.s32 %v870, %v892
      %v919 = vadd.s32 %v873, %v892
      %v920 = vadd.s32 %v876, %v892
      %v921 = vadd.s32 %v879, %v892
      %v922 = vadd.s32 %v882, %v892
      %v923 = vadd.s32 %v885, %v892
      %v924 = vadd.s32 %v888, %v892
      %v925 = vld [vmem:[%s352] sm:$0xff]
      %v926 = vld [vmem:[%s352 + $0x8] sm:$0xff]
      %v927 = vld [vmem:[%s352 + $0x10] sm:$0xff]
      %v928 = vld [vmem:[%s352 + $0x18] sm:$0xff]
      %v929 = vld [vmem:[%s352 + $0x20] sm:$0xff]
      %v930 = vld [vmem:[%s352 + $0x28] sm:$0xff]
      %v931 = vld [vmem:[%s352 + $0x30] sm:$0xff]
      %v932 = vld [vmem:[%s352 + $0x38] sm:$0xff]
      %v933 = vld [vmem:[%s352 + $0x40] sm:$0xff]
      %v934 = vld [vmem:[%s352 + $0x48] sm:$0xff]
      %v935 = vld [vmem:[%s352 + $0x50] sm:$0xff]
      %v936 = vld [vmem:[%s352 + $0x58] sm:$0xff]
      %v937 = vld [vmem:[%s352 + $0x60] sm:$0xff]
      %v938 = vld [vmem:[%s352 + $0x68] sm:$0xff]
      %v939 = vld [vmem:[%s352 + $0x70] sm:$0xff]
      %v940 = vld [vmem:[%s352 + $0x78] sm:$0xff]
      %v941 = vld [vmem:[%s352 + $0x80] sm:$0xff]
      %v942 = vld [vmem:[%s352 + $0x88] sm:$0xff]
      %v943 = vld [vmem:[%s352 + $0x90] sm:$0xff]
      %v944 = vld [vmem:[%s352 + $0x98] sm:$0xff]
      %v945 = vld [vmem:[%s352 + $0xa0] sm:$0xff]
      %v946 = vld [vmem:[%s352 + $0xa8] sm:$0xff]
      %v947 = vld [vmem:[%s352 + $0xb0] sm:$0xff]
      %v948 = vld [vmem:[%s352 + $0xb8] sm:$0xff]
      %v949 = vld [vmem:[%s352 + $0xc0] sm:$0xff]
      %v950 = vld [vmem:[%s352 + $0xc8] sm:$0xff]
      %v951 = vld [vmem:[%s352 + $0xd0] sm:$0xff]
      %v952 = vld [vmem:[%s352 + $0xd8] sm:$0xff]
      %v953 = vld [vmem:[%s352 + $0xe0] sm:$0xff]
      %v954 = vld [vmem:[%s352 + $0xe8] sm:$0xff]
      %v955 = vld [vmem:[%s352 + $0xf0] sm:$0xff]
      %v956 = vld [vmem:[%s352 + $0xf8] sm:$0xff]
      %v957 = vld [vmem:[%s6] sm:$0x1]
      %958 = vset.pattern.permute.xlu0 0
      %959 = vperm.xlu0 %958, %v925
      %v960 = vpop.permute.xlu0 %959
      %961 = vset.pattern.permute.xlu0 0
      %962 = vperm.xlu0 %961, %v926
      %v963 = vpop.permute.xlu0 %962
      %964 = vset.pattern.permute.xlu0 0
      %965 = vperm.xlu0 %964, %v927
      %v966 = vpop.permute.xlu0 %965
      %967 = vset.pattern.permute.xlu0 0
      %968 = vperm.xlu0 %967, %v928
      %v969 = vpop.permute.xlu0 %968
      %970 = vset.pattern.permute.xlu0 0
      %971 = vperm.xlu0 %970, %v929
      %v972 = vpop.permute.xlu0 %971
      %973 = vset.pattern.permute.xlu0 0
      %974 = vperm.xlu0 %973, %v930
      %v975 = vpop.permute.xlu0 %974
      %976 = vset.pattern.permute.xlu0 0
      %977 = vperm.xlu0 %976, %v931
      %v978 = vpop.permute.xlu0 %977
      %979 = vset.pattern.permute.xlu0 0
      %980 = vperm.xlu0 %979, %v932
      %v981 = vpop.permute.xlu0 %980
      %982 = vset.pattern.permute.xlu0 0
      %983 = vperm.xlu0 %982, %v933
      %v984 = vpop.permute.xlu0 %983
      %985 = vset.pattern.permute.xlu0 0
      %986 = vperm.xlu0 %985, %v934
      %v987 = vpop.permute.xlu0 %986
      %988 = vset.pattern.permute.xlu0 0
      %989 = vperm.xlu0 %988, %v935
      %v990 = vpop.permute.xlu0 %989
      %991 = vset.pattern.permute.xlu0 0
      %992 = vperm.xlu0 %991, %v936
      %v993 = vpop.permute.xlu0 %992
      %994 = vset.pattern.permute.xlu0 0
      %995 = vperm.xlu0 %994, %v937
      %v996 = vpop.permute.xlu0 %995
      %997 = vset.pattern.permute.xlu0 0
      %998 = vperm.xlu0 %997, %v938
      %v999 = vpop.permute.xlu0 %998
      %1000 = vset.pattern.permute.xlu0 0
      %1001 = vperm.xlu0 %1000, %v939
      %v1002 = vpop.permute.xlu0 %1001
      %1003 = vset.pattern.permute.xlu0 0
      %1004 = vperm.xlu0 %1003, %v940
      %v1005 = vpop.permute.xlu0 %1004
      %1006 = vset.pattern.permute.xlu0 0
      %1007 = vperm.xlu0 %1006, %v941
      %v1008 = vpop.permute.xlu0 %1007
      %1009 = vset.pattern.permute.xlu0 0
      %1010 = vperm.xlu0 %1009, %v942
      %v1011 = vpop.permute.xlu0 %1010
      %1012 = vset.pattern.permute.xlu0 0
      %1013 = vperm.xlu0 %1012, %v943
      %v1014 = vpop.permute.xlu0 %1013
      %1015 = vset.pattern.permute.xlu0 0
      %1016 = vperm.xlu0 %1015, %v944
      %v1017 = vpop.permute.xlu0 %1016
      %1018 = vset.pattern.permute.xlu0 0
      %1019 = vperm.xlu0 %1018, %v945
      %v1020 = vpop.permute.xlu0 %1019
      %1021 = vset.pattern.permute.xlu0 0
      %1022 = vperm.xlu0 %1021, %v946
      %v1023 = vpop.permute.xlu0 %1022
      %1024 = vset.pattern.permute.xlu0 0
      %1025 = vperm.xlu0 %1024, %v947
      %v1026 = vpop.permute.xlu0 %1025
      %1027 = vset.pattern.permute.xlu0 0
      %1028 = vperm.xlu0 %1027, %v948
      %v1029 = vpop.permute.xlu0 %1028
      %1030 = vset.pattern.permute.xlu0 0
      %1031 = vperm.xlu0 %1030, %v949
      %v1032 = vpop.permute.xlu0 %1031
      %1033 = vset.pattern.permute.xlu0 0
      %1034 = vperm.xlu0 %1033, %v950
      %v1035 = vpop.permute.xlu0 %1034
      %1036 = vset.pattern.permute.xlu0 0
      %1037 = vperm.xlu0 %1036, %v951
      %v1038 = vpop.permute.xlu0 %1037
      %1039 = vset.pattern.permute.xlu0 0
      %1040 = vperm.xlu0 %1039, %v952
      %v1041 = vpop.permute.xlu0 %1040
      %1042 = vset.pattern.permute.xlu0 0
      %1043 = vperm.xlu0 %1042, %v953
      %v1044 = vpop.permute.xlu0 %1043
      %1045 = vset.pattern.permute.xlu0 0
      %1046 = vperm.xlu0 %1045, %v954
      %v1047 = vpop.permute.xlu0 %1046
      %1048 = vset.pattern.permute.xlu0 0
      %1049 = vperm.xlu0 %1048, %v955
      %v1050 = vpop.permute.xlu0 %1049
      %1051 = vset.pattern.permute.xlu0 0
      %1052 = vperm.xlu0 %1051, %v956
      %v1053 = vpop.permute.xlu0 %1052
      %v1054 = vlaneseq
      %v1055 = vshrl.u32 %v1054, 7
      %v1056 = vsub.s32 0, %v1055
      %v1057 = vrot.slane %v957, %v1056
      %v1058 = vadd.s32 %v960, %v1057
      %v1059 = vadd.s32 %v963, %v1057
      %v1060 = vadd.s32 %v966, %v1057
      %v1061 = vadd.s32 %v969, %v1057
      %v1062 = vadd.s32 %v972, %v1057
      %v1063 = vadd.s32 %v975, %v1057
      %v1064 = vadd.s32 %v978, %v1057
      %v1065 = vadd.s32 %v981, %v1057
      %v1066 = vadd.s32 %v984, %v1057
      %v1067 = vadd.s32 %v987, %v1057
      %v1068 = vadd.s32 %v990, %v1057
      %v1069 = vadd.s32 %v993, %v1057
      %v1070 = vadd.s32 %v996, %v1057
      %v1071 = vadd.s32 %v999, %v1057
      %v1072 = vadd.s32 %v1002, %v1057
      %v1073 = vadd.s32 %v1005, %v1057
      %v1074 = vadd.s32 %v1008, %v1057
      %v1075 = vadd.s32 %v1011, %v1057
      %v1076 = vadd.s32 %v1014, %v1057
      %v1077 = vadd.s32 %v1017, %v1057
      %v1078 = vadd.s32 %v1020, %v1057
      %v1079 = vadd.s32 %v1023, %v1057
      %v1080 = vadd.s32 %v1026, %v1057
      %v1081 = vadd.s32 %v1029, %v1057
      %v1082 = vadd.s32 %v1032, %v1057
      %v1083 = vadd.s32 %v1035, %v1057
      %v1084 = vadd.s32 %v1038, %v1057
      %v1085 = vadd.s32 %v1041, %v1057
      %v1086 = vadd.s32 %v1044, %v1057
      %v1087 = vadd.s32 %v1047, %v1057
      %v1088 = vadd.s32 %v1050, %v1057
      %v1089 = vadd.s32 %v1053, %v1057
      %vm1090 = vcmp.ge.s32.totalorder %v893, 0
      %vm1091 = vcmp.ge.s32.totalorder %v894, 0
      %vm1092 = vcmp.ge.s32.totalorder %v895, 0
      %vm1093 = vcmp.ge.s32.totalorder %v896, 0
      %vm1094 = vcmp.ge.s32.totalorder %v897, 0
      %vm1095 = vcmp.ge.s32.totalorder %v898, 0
      %vm1096 = vcmp.ge.s32.totalorder %v899, 0
      %vm1097 = vcmp.ge.s32.totalorder %v900, 0
      %vm1098 = vcmp.ge.s32.totalorder %v901, 0
      %vm1099 = vcmp.ge.s32.totalorder %v902, 0
      %vm1100 = vcmp.ge.s32.totalorder %v903, 0
      %vm1101 = vcmp.ge.s32.totalorder %v904, 0
      %vm1102 = vcmp.ge.s32.totalorder %v905, 0
      %vm1103 = vcmp.ge.s32.totalorder %v906, 0
      %vm1104 = vcmp.ge.s32.totalorder %v907, 0
      %vm1105 = vcmp.ge.s32.totalorder %v908, 0
      %vm1106 = vcmp.ge.s32.totalorder %v909, 0
      %vm1107 = vcmp.ge.s32.totalorder %v910, 0
      %vm1108 = vcmp.ge.s32.totalorder %v911, 0
      %vm1109 = vcmp.ge.s32.totalorder %v912, 0
      %vm1110 = vcmp.ge.s32.totalorder %v913, 0
      %vm1111 = vcmp.ge.s32.totalorder %v914, 0
      %vm1112 = vcmp.ge.s32.totalorder %v915, 0
      %vm1113 = vcmp.ge.s32.totalorder %v916, 0
      %vm1114 = vcmp.ge.s32.totalorder %v917, 0
      %vm1115 = vcmp.ge.s32.totalorder %v918, 0
      %vm1116 = vcmp.ge.s32.totalorder %v919, 0
      %vm1117 = vcmp.ge.s32.totalorder %v920, 0
      %vm1118 = vcmp.ge.s32.totalorder %v921, 0
      %vm1119 = vcmp.ge.s32.totalorder %v922, 0
      %vm1120 = vcmp.ge.s32.totalorder %v923, 0
      %vm1121 = vcmp.ge.s32.totalorder %v924, 0
      %vm1122 = vcmp.lt.s32.totalorder %v893, 32
      %vm1123 = vcmp.lt.s32.totalorder %v894, 32
      %vm1124 = vcmp.lt.s32.totalorder %v895, 32
      %vm1125 = vcmp.lt.s32.totalorder %v896, 32
      %vm1126 = vcmp.lt.s32.totalorder %v897, 32
      %vm1127 = vcmp.lt.s32.totalorder %v898, 32
      %vm1128 = vcmp.lt.s32.totalorder %v899, 32
      %vm1129 = vcmp.lt.s32.totalorder %v900, 32
      %vm1130 = vcmp.lt.s32.totalorder %v901, 32
      %vm1131 = vcmp.lt.s32.totalorder %v902, 32
      %vm1132 = vcmp.lt.s32.totalorder %v903, 32
      %vm1133 = vcmp.lt.s32.totalorder %v904, 32
      %vm1134 = vcmp.lt.s32.totalorder %v905, 32
      %vm1135 = vcmp.lt.s32.totalorder %v906, 32
      %vm1136 = vcmp.lt.s32.totalorder %v907, 32
      %vm1137 = vcmp.lt.s32.totalorder %v908, 32
      %vm1138 = vcmp.lt.s32.totalorder %v909, 32
      %vm1139 = vcmp.lt.s32.totalorder %v910, 32
      %vm1140 = vcmp.lt.s32.totalorder %v911, 32
      %vm1141 = vcmp.lt.s32.totalorder %v912, 32
      %vm1142 = vcmp.lt.s32.totalorder %v913, 32
      %vm1143 = vcmp.lt.s32.totalorder %v914, 32
      %vm1144 = vcmp.lt.s32.totalorder %v915, 32
      %vm1145 = vcmp.lt.s32.totalorder %v916, 32
      %vm1146 = vcmp.lt.s32.totalorder %v917, 32
      %vm1147 = vcmp.lt.s32.totalorder %v918, 32
      %vm1148 = vcmp.lt.s32.totalorder %v919, 32
      %vm1149 = vcmp.lt.s32.totalorder %v920, 32
      %vm1150 = vcmp.lt.s32.totalorder %v921, 32
      %vm1151 = vcmp.lt.s32.totalorder %v922, 32
      %vm1152 = vcmp.lt.s32.totalorder %v923, 32
      %vm1153 = vcmp.lt.s32.totalorder %v924, 32
      %vm1154 = vmand %vm1090, %vm1122
      %vm1155 = vmand %vm1091, %vm1123
      %vm1156 = vmand %vm1092, %vm1124
      %vm1157 = vmand %vm1093, %vm1125
      %vm1158 = vmand %vm1094, %vm1126
      %vm1159 = vmand %vm1095, %vm1127
      %vm1160 = vmand %vm1096, %vm1128
      %vm1161 = vmand %vm1097, %vm1129
      %vm1162 = vmand %vm1098, %vm1130
      %vm1163 = vmand %vm1099, %vm1131
      %vm1164 = vmand %vm1100, %vm1132
      %vm1165 = vmand %vm1101, %vm1133
      %vm1166 = vmand %vm1102, %vm1134
      %vm1167 = vmand %vm1103, %vm1135
      %vm1168 = vmand %vm1104, %vm1136
      %vm1169 = vmand %vm1105, %vm1137
      %vm1170 = vmand %vm1106, %vm1138
      %vm1171 = vmand %vm1107, %vm1139
      %vm1172 = vmand %vm1108, %vm1140
      %vm1173 = vmand %vm1109, %vm1141
      %vm1174 = vmand %vm1110, %vm1142
      %vm1175 = vmand %vm1111, %vm1143
      %vm1176 = vmand %vm1112, %vm1144
      %vm1177 = vmand %vm1113, %vm1145
      %vm1178 = vmand %vm1114, %vm1146
      %vm1179 = vmand %vm1115, %vm1147
      %vm1180 = vmand %vm1116, %vm1148
      %vm1181 = vmand %vm1117, %vm1149
      %vm1182 = vmand %vm1118, %vm1150
      %vm1183 = vmand %vm1119, %vm1151
      %vm1184 = vmand %vm1120, %vm1152
      %vm1185 = vmand %vm1121, %vm1153
      %vm1186 = vcmp.ge.s32.totalorder %v1058, 0
      %vm1187 = vcmp.ge.s32.totalorder %v1059, 0
      %vm1188 = vcmp.ge.s32.totalorder %v1060, 0
      %vm1189 = vcmp.ge.s32.totalorder %v1061, 0
      %vm1190 = vcmp.ge.s32.totalorder %v1062, 0
      %vm1191 = vcmp.ge.s32.totalorder %v1063, 0
      %vm1192 = vcmp.ge.s32.totalorder %v1064, 0
      %vm1193 = vcmp.ge.s32.totalorder %v1065, 0
      %vm1194 = vcmp.ge.s32.totalorder %v1066, 0
      %vm1195 = vcmp.ge.s32.totalorder %v1067, 0
      %vm1196 = vcmp.ge.s32.totalorder %v1068, 0
      %vm1197 = vcmp.ge.s32.totalorder %v1069, 0
      %vm1198 = vcmp.ge.s32.totalorder %v1070, 0
      %vm1199 = vcmp.ge.s32.totalorder %v1071, 0
      %vm1200 = vcmp.ge.s32.totalorder %v1072, 0
      %vm1201 = vcmp.ge.s32.totalorder %v1073, 0
      %vm1202 = vcmp.ge.s32.totalorder %v1074, 0
      %vm1203 = vcmp.ge.s32.totalorder %v1075, 0
      %vm1204 = vcmp.ge.s32.totalorder %v1076, 0
      %vm1205 = vcmp.ge.s32.totalorder %v1077, 0
      %vm1206 = vcmp.ge.s32.totalorder %v1078, 0
      %vm1207 = vcmp.ge.s32.totalorder %v1079, 0
      %vm1208 = vcmp.ge.s32.totalorder %v1080, 0
      %vm1209 = vcmp.ge.s32.totalorder %v1081, 0
      %vm1210 = vcmp.ge.s32.totalorder %v1082, 0
      %vm1211 = vcmp.ge.s32.totalorder %v1083, 0
      %vm1212 = vcmp.ge.s32.totalorder %v1084, 0
      %vm1213 = vcmp.ge.s32.totalorder %v1085, 0
      %vm1214 = vcmp.ge.s32.totalorder %v1086, 0
      %vm1215 = vcmp.ge.s32.totalorder %v1087, 0
      %vm1216 = vcmp.ge.s32.totalorder %v1088, 0
      %vm1217 = vcmp.ge.s32.totalorder %v1089, 0
      %vm1218 = vmand %vm1154, %vm1186
      %vm1219 = vmand %vm1155, %vm1187
      %vm1220 = vmand %vm1156, %vm1188
      %vm1221 = vmand %vm1157, %vm1189
      %vm1222 = vmand %vm1158, %vm1190
      %vm1223 = vmand %vm1159, %vm1191
      %vm1224 = vmand %vm1160, %vm1192
      %vm1225 = vmand %vm1161, %vm1193
      %vm1226 = vmand %vm1162, %vm1194
      %vm1227 = vmand %vm1163, %vm1195
      %vm1228 = vmand %vm1164, %vm1196
      %vm1229 = vmand %vm1165, %vm1197
      %vm1230 = vmand %vm1166, %vm1198
      %vm1231 = vmand %vm1167, %vm1199
      %vm1232 = vmand %vm1168, %vm1200
      %vm1233 = vmand %vm1169, %vm1201
      %vm1234 = vmand %vm1170, %vm1202
      %vm1235 = vmand %vm1171, %vm1203
      %vm1236 = vmand %vm1172, %vm1204
      %vm1237 = vmand %vm1173, %vm1205
      %vm1238 = vmand %vm1174, %vm1206
      %vm1239 = vmand %vm1175, %vm1207
      %vm1240 = vmand %vm1176, %vm1208
      %vm1241 = vmand %vm1177, %vm1209
      %vm1242 = vmand %vm1178, %vm1210
      %vm1243 = vmand %vm1179, %vm1211
      %vm1244 = vmand %vm1180, %vm1212
      %vm1245 = vmand %vm1181, %vm1213
      %vm1246 = vmand %vm1182, %vm1214
      %vm1247 = vmand %vm1183, %vm1215
      %vm1248 = vmand %vm1184, %vm1216
      %vm1249 = vmand %vm1185, %vm1217
      %vm1250 = vcmp.lt.s32.totalorder %v1058, 32
      %vm1251 = vcmp.lt.s32.totalorder %v1059, 32
      %vm1252 = vcmp.lt.s32.totalorder %v1060, 32
      %vm1253 = vcmp.lt.s32.totalorder %v1061, 32
      %vm1254 = vcmp.lt.s32.totalorder %v1062, 32
      %vm1255 = vcmp.lt.s32.totalorder %v1063, 32
      %vm1256 = vcmp.lt.s32.totalorder %v1064, 32
      %vm1257 = vcmp.lt.s32.totalorder %v1065, 32
      %vm1258 = vcmp.lt.s32.totalorder %v1066, 32
      %vm1259 = vcmp.lt.s32.totalorder %v1067, 32
      %vm1260 = vcmp.lt.s32.totalorder %v1068, 32
      %vm1261 = vcmp.lt.s32.totalorder %v1069, 32
      %vm1262 = vcmp.lt.s32.totalorder %v1070, 32
      %vm1263 = vcmp.lt.s32.totalorder %v1071, 32
      %vm1264 = vcmp.lt.s32.totalorder %v1072, 32
      %vm1265 = vcmp.lt.s32.totalorder %v1073, 32
      %vm1266 = vcmp.lt.s32.totalorder %v1074, 32
      %vm1267 = vcmp.lt.s32.totalorder %v1075, 32
      %vm1268 = vcmp.lt.s32.totalorder %v1076, 32
      %vm1269 = vcmp.lt.s32.totalorder %v1077, 32
      %vm1270 = vcmp.lt.s32.totalorder %v1078, 32
      %vm1271 = vcmp.lt.s32.totalorder %v1079, 32
      %vm1272 = vcmp.lt.s32.totalorder %v1080, 32
      %vm1273 = vcmp.lt.s32.totalorder %v1081, 32
      %vm1274 = vcmp.lt.s32.totalorder %v1082, 32
      %vm1275 = vcmp.lt.s32.totalorder %v1083, 32
      %vm1276 = vcmp.lt.s32.totalorder %v1084, 32
      %vm1277 = vcmp.lt.s32.totalorder %v1085, 32
      %vm1278 = vcmp.lt.s32.totalorder %v1086, 32
      %vm1279 = vcmp.lt.s32.totalorder %v1087, 32
      %vm1280 = vcmp.lt.s32.totalorder %v1088, 32
      %vm1281 = vcmp.lt.s32.totalorder %v1089, 32
      %vm1282 = vmand %vm1218, %vm1250
      %vm1283 = vmand %vm1219, %vm1251
      %vm1284 = vmand %vm1220, %vm1252
      %vm1285 = vmand %vm1221, %vm1253
      %vm1286 = vmand %vm1222, %vm1254
      %vm1287 = vmand %vm1223, %vm1255
      %vm1288 = vmand %vm1224, %vm1256
      %vm1289 = vmand %vm1225, %vm1257
      %vm1290 = vmand %vm1226, %vm1258
      %vm1291 = vmand %vm1227, %vm1259
      %vm1292 = vmand %vm1228, %vm1260
      %vm1293 = vmand %vm1229, %vm1261
      %vm1294 = vmand %vm1230, %vm1262
      %vm1295 = vmand %vm1231, %vm1263
      %vm1296 = vmand %vm1232, %vm1264
      %vm1297 = vmand %vm1233, %vm1265
      %vm1298 = vmand %vm1234, %vm1266
      %vm1299 = vmand %vm1235, %vm1267
      %vm1300 = vmand %vm1236, %vm1268
      %vm1301 = vmand %vm1237, %vm1269
      %vm1302 = vmand %vm1238, %vm1270
      %vm1303 = vmand %vm1239, %vm1271
      %vm1304 = vmand %vm1240, %vm1272
      %vm1305 = vmand %vm1241, %vm1273
      %vm1306 = vmand %vm1242, %vm1274
      %vm1307 = vmand %vm1243, %vm1275
      %vm1308 = vmand %vm1244, %vm1276
      %vm1309 = vmand %vm1245, %vm1277
      %vm1310 = vmand %vm1246, %vm1278
      %vm1311 = vmand %vm1247, %vm1279
      %vm1312 = vmand %vm1248, %vm1280
      %vm1313 = vmand %vm1249, %vm1281
      %v1314 = vsel %vm1282, %v569, 0.0
      %v1315 = vsel %vm1283, %v574, 0.0
      %v1316 = vsel %vm1284, %v579, 0.0
      %v1317 = vsel %vm1285, %v584, 0.0
      %v1318 = vsel %vm1286, %v589, 0.0
      %v1319 = vsel %vm1287, %v594, 0.0
      %v1320 = vsel %vm1288, %v599, 0.0
      %v1321 = vsel %vm1289, %v604, 0.0
      %v1322 = vsel %vm1290, %v609, 0.0
      %v1323 = vsel %vm1291, %v614, 0.0
      %v1324 = vsel %vm1292, %v619, 0.0
      %v1325 = vsel %vm1293, %v624, 0.0
      %v1326 = vsel %vm1294, %v629, 0.0
      %v1327 = vsel %vm1295, %v634, 0.0
      %v1328 = vsel %vm1296, %v639, 0.0
      %v1329 = vsel %vm1297, %v644, 0.0
      %v1330 = vsel %vm1298, %v649, 0.0
      %v1331 = vsel %vm1299, %v654, 0.0
      %v1332 = vsel %vm1300, %v659, 0.0
      %v1333 = vsel %vm1301, %v664, 0.0
      %v1334 = vsel %vm1302, %v669, 0.0
      %v1335 = vsel %vm1303, %v674, 0.0
      %v1336 = vsel %vm1304, %v679, 0.0
      %v1337 = vsel %vm1305, %v684, 0.0
      %v1338 = vsel %vm1306, %v689, 0.0
      %v1339 = vsel %vm1307, %v694, 0.0
      %v1340 = vsel %vm1308, %v699, 0.0
      %v1341 = vsel %vm1309, %v704, 0.0
      %v1342 = vsel %vm1310, %v709, 0.0
      %v1343 = vsel %vm1311, %v714, 0.0
      %v1344 = vsel %vm1312, %v719, 0.0
      %v1345 = vsel %vm1313, %v724, 0.0
      %v1346 = vsel %vm727, %v1314, 0.0
      %v1347 = vsel %vm727, %v1315, 0.0
      %v1348 = vadd.f32 %v1346, %v1347
      %v1349 = vsel %vm727, %v1316, 0.0
      %v1350 = vadd.f32 %v1348, %v1349
      %v1351 = vsel %vm727, %v1317, 0.0
      %v1352 = vadd.f32 %v1350, %v1351
      %v1353 = vsel %vm727, %v1318, 0.0
      %v1354 = vadd.f32 %v1352, %v1353
      %v1355 = vsel %vm727, %v1319, 0.0
      %v1356 = vadd.f32 %v1354, %v1355
      %v1357 = vsel %vm727, %v1320, 0.0
      %v1358 = vadd.f32 %v1356, %v1357
      %v1359 = vsel %vm727, %v1321, 0.0
      %v1360 = vadd.f32 %v1358, %v1359
      %v1361 = vsel %vm727, %v1322, 0.0
      %v1362 = vadd.f32 %v1360, %v1361
      %v1363 = vsel %vm727, %v1323, 0.0
      %v1364 = vadd.f32 %v1362, %v1363
      %v1365 = vsel %vm727, %v1324, 0.0
      %v1366 = vadd.f32 %v1364, %v1365
      %v1367 = vsel %vm727, %v1325, 0.0
      %v1368 = vadd.f32 %v1366, %v1367
      %v1369 = vsel %vm727, %v1326, 0.0
      %v1370 = vadd.f32 %v1368, %v1369
      %v1371 = vsel %vm727, %v1327, 0.0
      %v1372 = vadd.f32 %v1370, %v1371
      %v1373 = vsel %vm727, %v1328, 0.0
      %v1374 = vadd.f32 %v1372, %v1373
      %v1375 = vsel %vm727, %v1329, 0.0
      %v1376 = vadd.f32 %v1374, %v1375
      %v1377 = vsel %vm727, %v1330, 0.0
      %v1378 = vadd.f32 %v1376, %v1377
      %v1379 = vsel %vm727, %v1331, 0.0
      %v1380 = vadd.f32 %v1378, %v1379
      %v1381 = vsel %vm727, %v1332, 0.0
      %v1382 = vadd.f32 %v1380, %v1381
      %v1383 = vsel %vm727, %v1333, 0.0
      %v1384 = vadd.f32 %v1382, %v1383
      %v1385 = vsel %vm727, %v1334, 0.0
      %v1386 = vadd.f32 %v1384, %v1385
      %v1387 = vsel %vm727, %v1335, 0.0
      %v1388 = vadd.f32 %v1386, %v1387
      %v1389 = vsel %vm727, %v1336, 0.0
      %v1390 = vadd.f32 %v1388, %v1389
      %v1391 = vsel %vm727, %v1337, 0.0
      %v1392 = vadd.f32 %v1390, %v1391
      %v1393 = vsel %vm727, %v1338, 0.0
      %v1394 = vadd.f32 %v1392, %v1393
      %v1395 = vsel %vm727, %v1339, 0.0
      %v1396 = vadd.f32 %v1394, %v1395
      %v1397 = vsel %vm727, %v1340, 0.0
      %v1398 = vadd.f32 %v1396, %v1397
      %v1399 = vsel %vm727, %v1341, 0.0
      %v1400 = vadd.f32 %v1398, %v1399
      %v1401 = vsel %vm727, %v1342, 0.0
      %v1402 = vadd.f32 %v1400, %v1401
      %v1403 = vsel %vm727, %v1343, 0.0
      %v1404 = vadd.f32 %v1402, %v1403
      %v1405 = vsel %vm727, %v1344, 0.0
      %v1406 = vadd.f32 %v1404, %v1405
      %v1407 = vsel %vm727, %v1345, 0.0
      %v1408 = vadd.f32 %v1406, %v1407
      %v1409 = vrot.slane %v1408, 4
      %v1410 = vadd.f32 %v1408, %v1409
      %v1411 = vrot.slane %v1410, 2
      %v1412 = vadd.f32 %v1410, %v1411
      %v1413 = vrot.slane %v1412, 1
      %v1414 = vadd.f32 %v1412, %v1413
      %v1415 = vmul.f32 %v1314, %v1314
      %v1416 = vmul.f32 %v1315, %v1315
      %v1417 = vmul.f32 %v1316, %v1316
      %v1418 = vmul.f32 %v1317, %v1317
      %v1419 = vmul.f32 %v1318, %v1318
      %v1420 = vmul.f32 %v1319, %v1319
      %v1421 = vmul.f32 %v1320, %v1320
      %v1422 = vmul.f32 %v1321, %v1321
      %v1423 = vmul.f32 %v1322, %v1322
      %v1424 = vmul.f32 %v1323, %v1323
      %v1425 = vmul.f32 %v1324, %v1324
      %v1426 = vmul.f32 %v1325, %v1325
      %v1427 = vmul.f32 %v1326, %v1326
      %v1428 = vmul.f32 %v1327, %v1327
      %v1429 = vmul.f32 %v1328, %v1328
      %v1430 = vmul.f32 %v1329, %v1329
      %v1431 = vmul.f32 %v1330, %v1330
      %v1432 = vmul.f32 %v1331, %v1331
      %v1433 = vmul.f32 %v1332, %v1332
      %v1434 = vmul.f32 %v1333, %v1333
      %v1435 = vmul.f32 %v1334, %v1334
      %v1436 = vmul.f32 %v1335, %v1335
      %v1437 = vmul.f32 %v1336, %v1336
      %v1438 = vmul.f32 %v1337, %v1337
      %v1439 = vmul.f32 %v1338, %v1338
      %v1440 = vmul.f32 %v1339, %v1339
      %v1441 = vmul.f32 %v1340, %v1340
      %v1442 = vmul.f32 %v1341, %v1341
      %v1443 = vmul.f32 %v1342, %v1342
      %v1444 = vmul.f32 %v1343, %v1343
      %v1445 = vmul.f32 %v1344, %v1344
      %v1446 = vmul.f32 %v1345, %v1345
      %v1447 = vsel %vm727, %v1415, 0.0
      %v1448 = vsel %vm727, %v1416, 0.0
      %v1449 = vadd.f32 %v1447, %v1448
      %v1450 = vsel %vm727, %v1417, 0.0
      %v1451 = vadd.f32 %v1449, %v1450
      %v1452 = vsel %vm727, %v1418, 0.0
      %v1453 = vadd.f32 %v1451, %v1452
      %v1454 = vsel %vm727, %v1419, 0.0
      %v1455 = vadd.f32 %v1453, %v1454
      %v1456 = vsel %vm727, %v1420, 0.0
      %v1457 = vadd.f32 %v1455, %v1456
      %v1458 = vsel %vm727, %v1421, 0.0
      %v1459 = vadd.f32 %v1457, %v1458
      %v1460 = vsel %vm727, %v1422, 0.0
      %v1461 = vadd.f32 %v1459, %v1460
      %v1462 = vsel %vm727, %v1423, 0.0
      %v1463 = vadd.f32 %v1461, %v1462
      %v1464 = vsel %vm727, %v1424, 0.0
      %v1465 = vadd.f32 %v1463, %v1464
      %v1466 = vsel %vm727, %v1425, 0.0
      %v1467 = vadd.f32 %v1465, %v1466
      %v1468 = vsel %vm727, %v1426, 0.0
      %v1469 = vadd.f32 %v1467, %v1468
      %v1470 = vsel %vm727, %v1427, 0.0
      %v1471 = vadd.f32 %v1469, %v1470
      %v1472 = vsel %vm727, %v1428, 0.0
      %v1473 = vadd.f32 %v1471, %v1472
      %v1474 = vsel %vm727, %v1429, 0.0
      %v1475 = vadd.f32 %v1473, %v1474
      %v1476 = vsel %vm727, %v1430, 0.0
      %v1477 = vadd.f32 %v1475, %v1476
      %v1478 = vsel %vm727, %v1431, 0.0
      %v1479 = vadd.f32 %v1477, %v1478
      %v1480 = vsel %vm727, %v1432, 0.0
      %v1481 = vadd.f32 %v1479, %v1480
      %v1482 = vsel %vm727, %v1433, 0.0
      %v1483 = vadd.f32 %v1481, %v1482
      %v1484 = vsel %vm727, %v1434, 0.0
      %v1485 = vadd.f32 %v1483, %v1484
      %v1486 = vsel %vm727, %v1435, 0.0
      %v1487 = vadd.f32 %v1485, %v1486
      %v1488 = vsel %vm727, %v1436, 0.0
      %v1489 = vadd.f32 %v1487, %v1488
      %v1490 = vsel %vm727, %v1437, 0.0
      %v1491 = vadd.f32 %v1489, %v1490
      %v1492 = vsel %vm727, %v1438, 0.0
      %v1493 = vadd.f32 %v1491, %v1492
      %v1494 = vsel %vm727, %v1439, 0.0
      %v1495 = vadd.f32 %v1493, %v1494
      %v1496 = vsel %vm727, %v1440, 0.0
      %v1497 = vadd.f32 %v1495, %v1496
      %v1498 = vsel %vm727, %v1441, 0.0
      %v1499 = vadd.f32 %v1497, %v1498
      %v1500 = vsel %vm727, %v1442, 0.0
      %v1501 = vadd.f32 %v1499, %v1500
      %v1502 = vsel %vm727, %v1443, 0.0
      %v1503 = vadd.f32 %v1501, %v1502
      %v1504 = vsel %vm727, %v1444, 0.0
      %v1505 = vadd.f32 %v1503, %v1504
      %v1506 = vsel %vm727, %v1445, 0.0
      %v1507 = vadd.f32 %v1505, %v1506
      %v1508 = vsel %vm727, %v1446, 0.0
      %v1509 = vadd.f32 %v1507, %v1508
      %v1510 = vrot.slane %v1509, 4
      %v1511 = vadd.f32 %v1509, %v1510
      %v1512 = vrot.slane %v1511, 2
      %v1513 = vadd.f32 %v1511, %v1512
      %v1514 = vrot.slane %v1513, 1
      %v1515 = vadd.f32 %v1513, %v1514
      %vm1516 = vcmask 1040384
      %v1517 = vsel %vm1516, %v1414, %v1515
      %vm1518 = vcmask 254976
      %1519 = vst.msk [vmem:[%s363] sm:$0x3] %vm1518, %v1517
      %s1520 = smul.u32 32, %s20
      %p1521 = scmp.lt.s32.totalorder %s1520, 95
      %s1522 = scalar_select %p1521, %s1520, 95
      %s1523 = smul.addr %s1522, 8
      %s1524 = scalar_lea.vmem %s7, %s1523
      %p1525 = scmp.lt.s32.totalorder %s20, 2
      %s1526 = scalar_select %p1525, %s20, 2
      %s1527 = smul.addr %s1526, 2
      %s1528 = scalar_lea.vmem %s8, %s1527
      // Predicated region
      $region49: #{decode_block_forward.3} parent=47 // pred_check
        %p1529 = pneg %p200
      $region50: #{decode_block_forward.3} parent=47 // pred_check_branch
        %1531 = sbr.rel (%p1529) target = $region52
      $region51: #{decode_block_forward.3} parent=47 // pred_region
        %s1532 = smul.u32 32, %s20
      $region52: #{decode_block_forward.3} parent=47 // pred_fallthru
        _
      // Predicated region
      $region53: #{decode_block_forward.3} parent=47 // pred_check
        %p1533 = pneg %p226
      $region54: #{decode_block_forward.3} parent=47 // pred_check_branch
        %1535 = sbr.rel (%p1533) target = $region56
      $region55: #{decode_block_forward.3} parent=47 // pred_region
        _
      $region56: #{decode_block_forward.3} parent=47 // pred_fallthru
        _
    $region48: #{decode_block_forward.3} parent=5 // pred_fallthru
      _
    %p1536 = scmp.le.s32.totalorder 2, %s15
    // Predicated region
    $region57: #{decode_block_forward.3} parent=5 // pred_check
      %p1537 = pneg %p1536
    $region58: #{decode_block_forward.3} parent=5 // pred_check_branch
      %1539 = sbr.rel (%p1537) target = $region60
    $region59: #{decode_block_forward.3} parent=5 // pred_region
      %s1540 = ssub.s32 %s15, 2
      // Predicated region
      $region61: #{decode_block_forward.3} parent=59 // pred_check
        %p1541 = pneg %p206
      $region62: #{decode_block_forward.3} parent=59 // pred_check_branch
        %1543 = sbr.rel (%p1541) target = $region64
      $region63: #{decode_block_forward.3} parent=59 // pred_region
        %s1544 = smul.u32 32, %s21
        %p1545 = scmp.lt.s32.totalorder %s1544, 95
        %s1546 = scalar_select %p1545, %s1544, 95
        %s1547 = smul.addr %s1546, 8
        %s1548 = scalar_lea.vmem %s7, %s1547
      $region64: #{decode_block_forward.3} parent=59 // pred_fallthru
        _
      // Predicated region
      $region65: #{decode_block_forward.3} parent=59 // pred_check
        %p1549 = pneg %p232
      $region66: #{decode_block_forward.3} parent=59 // pred_check_branch
        %1551 = sbr.rel (%p1549) target = $region68
      $region67: #{decode_block_forward.3} parent=59 // pred_region
        %p1552 = scmp.lt.s32.totalorder %s21, 2
        %s1553 = scalar_select %p1552, %s21, 2
        %s1554 = smul.addr %s1553, 2
        %s1555 = scalar_lea.vmem %s8, %s1554
      $region68: #{decode_block_forward.3} parent=59 // pred_fallthru
        _
    $region60: #{decode_block_forward.3} parent=5 // pred_fallthru
      _
  $region6: #{decode_block_forward.3} parent=0 // loop_footer
    %s19 = sadd.s32 1, %s15
  $region7: #{decode_block_forward.3} parent=0 // loop_footer_branch
    %14 = sbr.rel target = $region3
  $region8: #{decode_block_forward.3} parent=0 // loop_exit
    _

// kernel: decode_block_forward.4
$region0: #{decode_block_forward.4}
  #allocation0 [shape = 'u32[]', space=smem, size = 0x4, offset = 0x4, fixed_abs, tag = 'smem constant byte address 0x4 - core index']
  #allocation1 [shape = 'u32[144,128]{1,0:T(1,128)}', space=vmem, size = 0x12000, scoped, tag = 'internal scratch']
  %s0 = inlined_call_operand.vmem [shape: f32[2,32,256], index: 0, kind: input, shape index: {}]
  %s1 = inlined_call_operand.vmem [shape: f32[1,256], index: 1, kind: input, shape index: {}]
  %s2 = inlined_call_operand.vmem [shape: f32[1,256], index: 2, kind: input, shape index: {}]
  %s3 = inlined_call_operand.vmem [shape: f32[64,32], index: 3, kind: input, shape index: {}]
  %s4 = inlined_call_operand.vmem [shape: f32[2,64,256], index: 4, kind: output, shape index: {}]
  %s5 = sld [smem:[#allocation0]]
  $region49: #{decode_block_forward.4} parent=0
    _
  %s7 = ssub.s32 1, %s5
  %s8 = scalar_select 0, %s7, %s5
  loop: start=0, step=1, limit=4
  $region2: #{decode_block_forward.4} parent=0 // loop_pre_header
    _
  $region3: #{decode_block_forward.4} parent=0 // loop_header
    %s10 = sphi 0, %s14
    %p11 = scmp.ge.s32.totalorder %s10, 4
    %s20 = sphi 0, %s22
    %s23 = sphi 0, %s20
    %s24 = sphi 0, %s23
    %s40 = sphi 0, %s24
    %s44 = sphi 0, %s44
    %s46 = sphi 0, %s44
    %s47 = sphi 0, %s46
    %s61 = sphi 0, %s47
    %s65 = sphi 0, %s65
    %s67 = sphi 0, %s65
    %s68 = sphi 0, %s67
    %s82 = sphi 0, %s68
    %s86 = sphi 0, %s86
    %s88 = sphi 0, %s86
    %s89 = sphi 0, %s88
    %s103 = sphi 0, %s89
    %s109 = sphi 0, %s111
    %s112 = sphi 0, %s109
    %s113 = sphi 0, %s112
    %s129 = sphi 0, %s113
  $region4: #{decode_block_forward.4} parent=0 // loop_header_branch
    %13 = sbr.rel (%p11) target = $region8
  $region5: #{decode_block_forward.4} parent=0 // loop_body
    %s15 = ssub.s32 %s10, 1
    %s16 = ssub.s32 %s10, 2
    %s17 = sadd.s32 %s10, 1
    %s18 = ssub.s32 %s10, %s17
    %p19 = scmp.eq.s32.totalorder %s18, 0
    %s21 = sadd.s32 %s20, 1
    %s22 = scalar_select %p19, %s20, %s21
    %p25 = pneg %p19
    %p26 = scmp.eq.s32.totalorder %s10, 1
    %p27 = por %p25, %p26
    %p28 = scmp.ne.s32.totalorder %s20, %s23
    %p29 = scmp.eq.s32.totalorder %s10, 0
    %p30 = por %p28, %p29
    %p31 = scmp.ne.s32.totalorder %s20, %s23
    %p32 = scmp.eq.s32.totalorder %s15, 1
    %p33 = por %p31, %p32
    %p34 = scmp.ne.s32.totalorder %s23, %s24
    %p35 = scmp.eq.s32.totalorder %s15, 0
    %p36 = por %p34, %p35
    %p37 = scmp.ne.s32.totalorder %s23, %s24
    %p38 = scmp.eq.s32.totalorder %s16, 1
    %p39 = por %p37, %p38
    %p41 = scmp.ne.s32.totalorder %s24, %s40
    %p42 = scmp.eq.s32.totalorder %s16, 0
    %p43 = por %p41, %p42
    %s45 = sadd.s32 %s44, 1
    %p48 = scmp.eq.s32.totalorder %s10, 1
    %p49 = scmp.ne.s32.totalorder %s44, %s46
    %p50 = scmp.eq.s32.totalorder %s10, 0
    %p51 = por %p49, %p50
    %p52 = scmp.ne.s32.totalorder %s44, %s46
    %p53 = scmp.eq.s32.totalorder %s15, 1
    %p54 = por %p52, %p53
    %p55 = scmp.ne.s32.totalorder %s46, %s47
    %p56 = scmp.eq.s32.totalorder %s15, 0
    %p57 = por %p55, %p56
    %p58 = scmp.ne.s32.totalorder %s46, %s47
    %p59 = scmp.eq.s32.totalorder %s16, 1
    %p60 = por %p58, %p59
    %p62 = scmp.ne.s32.totalorder %s47, %s61
    %p63 = scmp.eq.s32.totalorder %s16, 0
    %p64 = por %p62, %p63
    %s66 = sadd.s32 %s65, 1
    %p69 = scmp.eq.s32.totalorder %s10, 1
    %p70 = scmp.ne.s32.totalorder %s65, %s67
    %p71 = scmp.eq.s32.totalorder %s10, 0
    %p72 = por %p70, %p71
    %p73 = scmp.ne.s32.totalorder %s65, %s67
    %p74 = scmp.eq.s32.totalorder %s15, 1
    %p75 = por %p73, %p74
    %p76 = scmp.ne.s32.totalorder %s67, %s68
    %p77 = scmp.eq.s32.totalorder %s15, 0
    %p78 = por %p76, %p77
    %p79 = scmp.ne.s32.totalorder %s67, %s68
    %p80 = scmp.eq.s32.totalorder %s16, 1
    %p81 = por %p79, %p80
    %p83 = scmp.ne.s32.totalorder %s68, %s82
    %p84 = scmp.eq.s32.totalorder %s16, 0
    %p85 = por %p83, %p84
    %s87 = sadd.s32 %s86, 1
    %p90 = scmp.eq.s32.totalorder %s10, 1
    %p91 = scmp.ne.s32.totalorder %s86, %s88
    %p92 = scmp.eq.s32.totalorder %s10, 0
    %p93 = por %p91, %p92
    %p94 = scmp.ne.s32.totalorder %s86, %s88
    %p95 = scmp.eq.s32.totalorder %s15, 1
    %p96 = por %p94, %p95
    %p97 = scmp.ne.s32.totalorder %s88, %s89
    %p98 = scmp.eq.s32.totalorder %s15, 0
    %p99 = por %p97, %p98
    %p100 = scmp.ne.s32.totalorder %s88, %s89
    %p101 = scmp.eq.s32.totalorder %s16, 1
    %p102 = por %p100, %p101
    %p104 = scmp.ne.s32.totalorder %s89, %s103
    %p105 = scmp.eq.s32.totalorder %s16, 0
    %p106 = por %p104, %p105
    %s107 = ssub.s32 %s10, %s17
    %p108 = scmp.eq.s32.totalorder %s107, 0
    %s110 = sadd.s32 %s109, 1
    %s111 = scalar_select %p108, %s109, %s110
    %p114 = pneg %p108
    %p115 = scmp.eq.s32.totalorder %s10, 1
    %p116 = por %p114, %p115
    %p117 = scmp.ne.s32.totalorder %s109, %s112
    %p118 = scmp.eq.s32.totalorder %s10, 0
    %p119 = por %p117, %p118
    %p120 = scmp.ne.s32.totalorder %s109, %s112
    %p121 = scmp.eq.s32.totalorder %s15, 1
    %p122 = por %p120, %p121
    %p123 = scmp.ne.s32.totalorder %s112, %s113
    %p124 = scmp.eq.s32.totalorder %s15, 0
    %p125 = por %p123, %p124
    %p126 = scmp.ne.s32.totalorder %s112, %s113
    %p127 = scmp.eq.s32.totalorder %s16, 1
    %p128 = por %p126, %p127
    %p130 = scmp.ne.s32.totalorder %s113, %s129
    %p131 = scmp.eq.s32.totalorder %s16, 0
    %p132 = por %p130, %p131
    %p133 = scmp.le.s32.totalorder 1, %s10
    %p134 = scmp.lt.s32.totalorder %s10, 3
    %p135 = pnand %p133, %p134
    %p136 = pneg %p135
    // Predicated region
    $region9: #{decode_block_forward.4} parent=5 // pred_check
      _
    $region10: #{decode_block_forward.4} parent=5 // pred_check_branch
      %138 = sbr.rel (%p135) target = $region12
    $region11: #{decode_block_forward.4} parent=5 // pred_region
      %s139 = ssub.s32 %s10, 1
      // Predicated region
      $region13: #{decode_block_forward.4} parent=11 // pred_check
        %p140 = pneg %p57
      $region14: #{decode_block_forward.4} parent=11 // pred_check_branch
        %142 = sbr.rel (%p140) target = $region16
      $region15: #{decode_block_forward.4} parent=11 // pred_region
        _
      $region16: #{decode_block_forward.4} parent=11 // pred_fallthru
        _
      // Predicated region
      $region17: #{decode_block_forward.4} parent=11 // pred_check
        %p143 = pneg %p78
      $region18: #{decode_block_forward.4} parent=11 // pred_check_branch
        %145 = sbr.rel (%p143) target = $region20
      $region19: #{decode_block_forward.4} parent=11 // pred_region
        _
      $region20: #{decode_block_forward.4} parent=11 // pred_fallthru
        _
      // Predicated region
      $region21: #{decode_block_forward.4} parent=11 // pred_check
        %p146 = pneg %p99
      $region22: #{decode_block_forward.4} parent=11 // pred_check_branch
        %148 = sbr.rel (%p146) target = $region24
      $region23: #{decode_block_forward.4} parent=11 // pred_region
        _
      $region24: #{decode_block_forward.4} parent=11 // pred_fallthru
        _
    $region12: #{decode_block_forward.4} parent=5 // pred_fallthru
      _
    %p149 = scmp.lt.s32.totalorder %s10, 2
    // Predicated region
    $region25: #{decode_block_forward.4} parent=5 // pred_check
      %p150 = pneg %p149
    $region26: #{decode_block_forward.4} parent=5 // pred_check_branch
      %152 = sbr.rel (%p150) target = $region28
    $region27: #{decode_block_forward.4} parent=5 // pred_region
      // Predicated region
      $region29: #{decode_block_forward.4} parent=27 // pred_check
        %p153 = pneg %p30
      $region30: #{decode_block_forward.4} parent=27 // pred_check_branch
        %155 = sbr.rel (%p153) target = $region32
      $region31: #{decode_block_forward.4} parent=27 // pred_region
        %p156 = scmp.lt.s32.totalorder %s10, 1
        %s157 = scalar_select %p156, %s10, 1
        %s158 = smul.addr %s157, 8
        %s159 = smul.addr %s158, 8
        %s160 = scalar_lea.vmem %s0, %s159
      $region32: #{decode_block_forward.4} parent=27 // pred_fallthru
        _
    $region28: #{decode_block_forward.4} parent=5 // pred_fallthru
      _
    %p161 = scmp.le.s32.totalorder 1, %s10
    %p162 = scmp.lt.s32.totalorder %s10, 3
    %p163 = pnand %p161, %p162
    %p164 = pneg %p163
    // Predicated region
    $region33: #{decode_block_forward.4} parent=5 // pred_check
      _
    $region34: #{decode_block_forward.4} parent=5 // pred_check_branch
      %166 = sbr.rel (%p163) target = $region36
    $region35: #{decode_block_forward.4} parent=5 // pred_region
      %s167 = ssub.s32 %s10, 1
      %p168 = scmp.lt.s32.totalorder %s15, 1
      %s169 = scalar_select %p168, %s15, 1
      %s170 = smul.addr %s169, 8
      %s171 = smul.addr %s170, 8
      %s172 = scalar_lea.vmem %s0, %s171
      %p173 = pneg %p36
      %p174 = pneg %p33
      %p175 = pneg %p57
      %p176 = pneg %p54
      %p177 = pneg %p78
      %p178 = pneg %p75
      %p179 = pneg %p99
      %p180 = pneg %p96
      %p181 = pneg %p125
      %p182 = pneg %p122
      %p183 = scmp.lt.s32.totalorder %s15, 1
      %s184 = scalar_select %p183, %s15, 1
      %s185 = smul.addr %s184, 16
      %s186 = smul.addr %s185, 8
      %s187 = scalar_lea.vmem %s4, %s186
      %p188 = scmp.lt.s32.totalorder %s15, 1
      %s189 = scalar_select %p188, %s15, 1
      %s190 = smul.addr %s189, 8
      %s191 = smul.addr %s190, 8
      %s192 = scalar_lea.vmem %s0, %s191
      %p193 = scmp.lt.s32.totalorder %s15, 1
      %s194 = scalar_select %p193, %s15, 1
      %s195 = smul.addr %s194, 16
      %s196 = smul.addr %s195, 8
      %s197 = scalar_lea.vmem %s4, %s196
      %v198 = vld [vmem:[%s192] sm:$0xff]
      %v199 = vld [vmem:[%s192 + $0x8] sm:$0xff]
      %v200 = vld [vmem:[%s192 + $0x10] sm:$0xff]
      %v201 = vld [vmem:[%s192 + $0x18] sm:$0xff]
      %v202 = vld [vmem:[%s192 + $0x20] sm:$0xff]
      %v203 = vld [vmem:[%s192 + $0x28] sm:$0xff]
      %v204 = vld [vmem:[%s192 + $0x30] sm:$0xff]
      %v205 = vld [vmem:[%s192 + $0x38] sm:$0xff]
      %v206 = vld [vmem:[%s1] sm:$0x3]
      %v208 = vlaneseq
      %v209 = vshrl.u32 %v208, 7
      %v210 = vsub.s32 0, %v209
      %v211 = vrot.slane %v206, %v210
      %v212 = vlaneseq
      %v213 = vshrl.u32 %v212, 7
      %v214 = vsub.s32 1, %v213
      %v215 = vrot.slane %v206, %v214
      %v218 = vmul.f32 %v198, %v211
      %v219 = vmul.f32 %v199, %v215
      %v220 = vmul.f32 %v200, %v211
      %v221 = vmul.f32 %v201, %v215
      %v222 = vmul.f32 %v202, %v211
      %v223 = vmul.f32 %v203, %v215
      %v224 = vmul.f32 %v204, %v211
      %v225 = vmul.f32 %v205, %v215
      %v226 = vld [vmem:[%s2] sm:$0x3]
      %v228 = vlaneseq
      %v229 = vshrl.u32 %v228, 7
      %v230 = vsub.s32 0, %v229
      %v231 = vrot.slane %v226, %v230
      %v232 = vlaneseq
      %v233 = vshrl.u32 %v232, 7
      %v234 = vsub.s32 1, %v233
      %v235 = vrot.slane %v226, %v234
      %v238 = vadd.f32 %v218, %v231
      %v239 = vadd.f32 %v219, %v235
      %v240 = vadd.f32 %v220, %v231
      %v241 = vadd.f32 %v221, %v235
      %v242 = vadd.f32 %v222, %v231
      %v243 = vadd.f32 %v223, %v235
      %v244 = vadd.f32 %v224, %v231
      %v245 = vadd.f32 %v225, %v235
      %v246 = vmax.f32 %v238, 0.0
      %v247 = vmax.f32 %v239, 0.0
      %v248 = vmax.f32 %v240, 0.0
      %v249 = vmax.f32 %v241, 0.0
      %v250 = vmax.f32 %v242, 0.0
      %v251 = vmax.f32 %v243, 0.0
      %v252 = vmax.f32 %v244, 0.0
      %v253 = vmax.f32 %v245, 0.0
      %v254 = vld [vmem:[%s3] sm:$0xff]
      %v255 = vld [vmem:[%s3 + $0x8] sm:$0xff]
      %v256 = vld [vmem:[%s3 + $0x10] sm:$0xff]
      %v257 = vld [vmem:[%s3 + $0x18] sm:$0xff]
      %v258 = vld [vmem:[%s3 + $0x20] sm:$0xff]
      %v259 = vld [vmem:[%s3 + $0x28] sm:$0xff]
      %v260 = vld [vmem:[%s3 + $0x30] sm:$0xff]
      %v261 = vld [vmem:[%s3 + $0x38] sm:$0xff]
      %vm262 = vcmask 261120
      %v264 = vsel %vm262, %v254, 0
      %v267 = vsel %vm262, %v255, 0
      %v270 = vsel %vm262, %v256, 0
      %v273 = vsel %vm262, %v257, 0
      %v276 = vsel %vm262, %v258, 0
      %v279 = vsel %vm262, %v259, 0
      %v282 = vsel %vm262, %v260, 0
      %v285 = vsel %vm262, %v261, 0
      %287 = vmatprep.subr.mxu0 0.0
      %288 = vmatpush1.msra.mxu0 0.0
      %289 = vmatprep.subr.mxu0 0.0
      %290 = vmatpush1.msra.mxu0 0.0
      %291 = vmatprep.subr.mxu0 0.0
      %292 = vmatpush1.msra.mxu0 0.0
      %293 = vmatprep.subr.mxu0 0.0
      %294 = vmatpush1.msra.mxu0 0.0
      %295 = vmatprep.subr.mxu0 0.0
      %296 = vmatpush1.msra.mxu0 0.0
      %297 = vmatprep.subr.mxu0 0.0
      %298 = vmatpush1.msra.mxu0 0.0
      %299 = vmatprep.subr.mxu0 0.0
      %300 = vmatpush1.msra.mxu0 0.0
      %301 = vmatprep.subr.mxu0 0.0
      %302 = vmatpush1.msra.mxu0 0.0
      %303 = vmatprep.subr.mxu0 0.0
      %304 = vmatpush1.msra.mxu0 0.0
      %305 = vmatprep.subr.mxu0 0.0
      %306 = vmatpush1.msra.mxu0 0.0
      %307 = vmatprep.subr.mxu0 0.0
      %308 = vmatpush1.msra.mxu0 0.0
      %309 = vmatprep.subr.mxu0 0.0
      %310 = vmatpush1.msra.mxu0 0.0
      %311 = vmatprep.subr.mxu0 %v253
      %312 = vmatpush1.msra.mxu0 %v252
      %313 = vmatprep.subr.mxu0 %v251
      %314 = vmatpush1.msra.mxu0 %v250
      %315 = vmatprep.subr.mxu0 %v249
      %316 = vmatpush1.msra.mxu0 %v248
      %317 = vmatprep.subr.mxu0 %v247
      %318 = vmatpush1.msra.mxu0 %v246
      %319 = vmatprep.subr.mxu0 0.0
      %320 = vmatpush2.msra.mxu0 0.0
      %321 = vmatprep.subr.mxu0 0.0
      %322 = vmatpush2.msra.mxu0 0.0
      %323 = vmatprep.subr.mxu0 0.0
      %324 = vmatpush2.msra.mxu0 0.0
      %325 = vmatprep.subr.mxu0 0.0
      %326 = vmatpush2.msra.mxu0 0.0
      %327 = vmatprep.subr.mxu0 0.0
      %328 = vmatpush2.msra.mxu0 0.0
      %329 = vmatprep.subr.mxu0 0.0
      %330 = vmatpush2.msra.mxu0 0.0
      %331 = vmatprep.subr.mxu0 0.0
      %332 = vmatpush2.msra.mxu0 0.0
      %333 = vmatprep.subr.mxu0 0.0
      %334 = vmatpush2.msra.mxu0 0.0
      %335 = vmatprep.subr.mxu0 0.0
      %336 = vmatpush2.msra.mxu0 0.0
      %337 = vmatprep.subr.mxu0 0.0
      %338 = vmatpush2.msra.mxu0 0.0
      %339 = vmatprep.subr.mxu0 0.0
      %340 = vmatpush2.msra.mxu0 0.0
      %341 = vmatprep.subr.mxu0 0.0
      %342 = vmatpush2.msra.mxu0 0.0
      %343 = vmatprep.subr.mxu0 0.0
      %344 = vmatpush2.msra.mxu0 0.0
      %345 = vmatprep.subr.mxu0 0.0
      %346 = vmatpush2.msra.mxu0 0.0
      %347 = vmatprep.subr.mxu0 0.0
      %348 = vmatpush2.msra.mxu0 0.0
      %349 = vmatprep.subr.mxu0 0.0
      %350 = vmatpush2.msra.mxu0 0.0
      %351 = vmatprep.mubr.f32.mxu0 0.0
      %352 = vmatmul.mubr.f32.gmra.mxu0 %v264
      %v353 = vpop.f32.mrf.mxu0
      %v354 = vadd.f32 0.0, %v353
      %v355 = vpop.f32.mrf.mxu0
      %v356 = vadd.f32 0.0, %v355
      %357 = vmatprep.mubr.f32.mxu0 0.0
      %358 = vmatmul.mubr.f32.gmra.mxu0 %v267
      %v359 = vpop.f32.mrf.mxu0
      %v360 = vadd.f32 0.0, %v359
      %v361 = vpop.f32.mrf.mxu0
      %v362 = vadd.f32 0.0, %v361
      %363 = vmatprep.mubr.f32.mxu0 0.0
      %364 = vmatmul.mubr.f32.gmra.mxu0 %v270
      %v365 = vpop.f32.mrf.mxu0
      %v366 = vadd.f32 0.0, %v365
      %v367 = vpop.f32.mrf.mxu0
      %v368 = vadd.f32 0.0, %v367
      %369 = vmatprep.mubr.f32.mxu0 0.0
      %370 = vmatmul.mubr.f32.gmra.mxu0 %v273
      %v371 = vpop.f32.mrf.mxu0
      %v372 = vadd.f32 0.0, %v371
      %v373 = vpop.f32.mrf.mxu0
      %v374 = vadd.f32 0.0, %v373
      %375 = vmatprep.mubr.f32.mxu0 0.0
      %376 = vmatmul.mubr.f32.gmra.mxu0 %v276
      %v377 = vpop.f32.mrf.mxu0
      %v378 = vadd.f32 0.0, %v377
      %v379 = vpop.f32.mrf.mxu0
      %v380 = vadd.f32 0.0, %v379
      %381 = vmatprep.mubr.f32.mxu0 0.0
      %382 = vmatmul.mubr.f32.gmra.mxu0 %v279
      %v383 = vpop.f32.mrf.mxu0
      %v384 = vadd.f32 0.0, %v383
      %v385 = vpop.f32.mrf.mxu0
      %v386 = vadd.f32 0.0, %v385
      %387 = vmatprep.mubr.f32.mxu0 0.0
      %388 = vmatmul.mubr.f32.gmra.mxu0 %v282
      %v389 = vpop.f32.mrf.mxu0
      %v390 = vadd.f32 0.0, %v389
      %v391 = vpop.f32.mrf.mxu0
      %v392 = vadd.f32 0.0, %v391
      %393 = vmatprep.mubr.f32.mxu0 0.0
      %394 = vmatmul.mubr.f32.gmra.mxu0 %v285
      %v395 = vpop.f32.mrf.mxu0
      %v396 = vadd.f32 0.0, %v395
      %v397 = vpop.f32.mrf.mxu0
      %v398 = vadd.f32 0.0, %v397
      %399 = vdwg.mxu0
      %400 = vst [vmem:[%s197] sm:$0xff] %v354
      %401 = vst [vmem:[%s197 + $0x8] sm:$0xff] %v356
      %402 = vst [vmem:[%s197 + $0x10] sm:$0xff] %v360
      %403 = vst [vmem:[%s197 + $0x18] sm:$0xff] %v362
      %404 = vst [vmem:[%s197 + $0x20] sm:$0xff] %v366
      %405 = vst [vmem:[%s197 + $0x28] sm:$0xff] %v368
      %406 = vst [vmem:[%s197 + $0x30] sm:$0xff] %v372
      %407 = vst [vmem:[%s197 + $0x38] sm:$0xff] %v374
      %408 = vst [vmem:[%s197 + $0x40] sm:$0xff] %v378
      %409 = vst [vmem:[%s197 + $0x48] sm:$0xff] %v380
      %410 = vst [vmem:[%s197 + $0x50] sm:$0xff] %v384
      %411 = vst [vmem:[%s197 + $0x58] sm:$0xff] %v386
      %412 = vst [vmem:[%s197 + $0x60] sm:$0xff] %v390
      %413 = vst [vmem:[%s197 + $0x68] sm:$0xff] %v392
      %414 = vst [vmem:[%s197 + $0x70] sm:$0xff] %v396
      %415 = vst [vmem:[%s197 + $0x78] sm:$0xff] %v398
      %p416 = scmp.lt.s32.totalorder %s15, 1
      %s417 = scalar_select %p416, %s15, 1
      %s418 = smul.addr %s417, 16
      %s419 = smul.addr %s418, 8
      %s420 = scalar_lea.vmem %s4, %s419
      // Predicated region
      $region37: #{decode_block_forward.4} parent=35 // pred_check
        %p421 = pneg %p122
      $region38: #{decode_block_forward.4} parent=35 // pred_check_branch
        %423 = sbr.rel (%p421) target = $region40
      $region39: #{decode_block_forward.4} parent=35 // pred_region
        _
      $region40: #{decode_block_forward.4} parent=35 // pred_fallthru
        _
    $region36: #{decode_block_forward.4} parent=5 // pred_fallthru
      _
    %p424 = scmp.le.s32.totalorder 2, %s10
    // Predicated region
    $region41: #{decode_block_forward.4} parent=5 // pred_check
      %p425 = pneg %p424
    $region42: #{decode_block_forward.4} parent=5 // pred_check_branch
      %427 = sbr.rel (%p425) target = $region44
    $region43: #{decode_block_forward.4} parent=5 // pred_region
      %s428 = ssub.s32 %s10, 2
      // Predicated region
      $region45: #{decode_block_forward.4} parent=43 // pred_check
        %p429 = pneg %p128
      $region46: #{decode_block_forward.4} parent=43 // pred_check_branch
        %431 = sbr.rel (%p429) target = $region48
      $region47: #{decode_block_forward.4} parent=43 // pred_region
        %p432 = scmp.lt.s32.totalorder %s16, 1
        %s433 = scalar_select %p432, %s16, 1
        %s434 = smul.addr %s433, 16
        %s435 = smul.addr %s434, 8
        %s436 = scalar_lea.vmem %s4, %s435
      $region48: #{decode_block_forward.4} parent=43 // pred_fallthru
        _
    $region44: #{decode_block_forward.4} parent=5 // pred_fallthru
      _
  $region6: #{decode_block_forward.4} parent=0 // loop_footer
    %s14 = sadd.s32 1, %s10
  $region7: #{decode_block_forward.4} parent=0 // loop_footer_branch
    %9 = sbr.rel target = $region3
  $region8: #{decode_block_forward.4} parent=0 // loop_exit
    _

// kernel: decode_block_forward.5
$region0: #{decode_block_forward.5}
  #allocation0 [shape = 'u32[]', space=smem, size = 0x4, offset = 0x4, fixed_abs, tag = 'smem constant byte address 0x4 - core index']
  #allocation1 [shape = 'u32[144,128]{1,0:T(1,128)}', space=vmem, size = 0x12000, scoped, tag = 'internal scratch']
  %s0 = inlined_call_operand.vmem [shape: f32[2,32,512], index: 0, kind: input, shape index: {}]
  %s1 = inlined_call_operand.vmem [shape: f32[64,32], index: 1, kind: input, shape index: {}]
  %s2 = inlined_call_operand.vmem [shape: f32[2,64,512], index: 2, kind: output, shape index: {}]
  %s3 = sld [smem:[#allocation0]]
  $region41: #{decode_block_forward.5} parent=0
    _
  %s5 = ssub.s32 1, %s3
  %s6 = scalar_select 0, %s5, %s3
  loop: start=0, step=1, limit=4
  $region2: #{decode_block_forward.5} parent=0 // loop_pre_header
    _
  $region3: #{decode_block_forward.5} parent=0 // loop_header
    %s8 = sphi 0, %s12
    %p9 = scmp.ge.s32.totalorder %s8, 4
    %s18 = sphi 0, %s20
    %s21 = sphi 0, %s18
    %s22 = sphi 0, %s21
    %s38 = sphi 0, %s22
    %s42 = sphi 0, %s42
    %s44 = sphi 0, %s42
    %s45 = sphi 0, %s44
    %s59 = sphi 0, %s45
    %s65 = sphi 0, %s67
    %s68 = sphi 0, %s65
    %s69 = sphi 0, %s68
    %s85 = sphi 0, %s69
  $region4: #{decode_block_forward.5} parent=0 // loop_header_branch
    %11 = sbr.rel (%p9) target = $region8
  $region5: #{decode_block_forward.5} parent=0 // loop_body
    %s13 = ssub.s32 %s8, 1
    %s14 = ssub.s32 %s8, 2
    %s15 = sadd.s32 %s8, 1
    %s16 = ssub.s32 %s8, %s15
    %p17 = scmp.eq.s32.totalorder %s16, 0
    %s19 = sadd.s32 %s18, 1
    %s20 = scalar_select %p17, %s18, %s19
    %p23 = pneg %p17
    %p24 = scmp.eq.s32.totalorder %s8, 1
    %p25 = por %p23, %p24
    %p26 = scmp.ne.s32.totalorder %s18, %s21
    %p27 = scmp.eq.s32.totalorder %s8, 0
    %p28 = por %p26, %p27
    %p29 = scmp.ne.s32.totalorder %s18, %s21
    %p30 = scmp.eq.s32.totalorder %s13, 1
    %p31 = por %p29, %p30
    %p32 = scmp.ne.s32.totalorder %s21, %s22
    %p33 = scmp.eq.s32.totalorder %s13, 0
    %p34 = por %p32, %p33
    %p35 = scmp.ne.s32.totalorder %s21, %s22
    %p36 = scmp.eq.s32.totalorder %s14, 1
    %p37 = por %p35, %p36
    %p39 = scmp.ne.s32.totalorder %s22, %s38
    %p40 = scmp.eq.s32.totalorder %s14, 0
    %p41 = por %p39, %p40
    %s43 = sadd.s32 %s42, 1
    %p46 = scmp.eq.s32.totalorder %s8, 1
    %p47 = scmp.ne.s32.totalorder %s42, %s44
    %p48 = scmp.eq.s32.totalorder %s8, 0
    %p49 = por %p47, %p48
    %p50 = scmp.ne.s32.totalorder %s42, %s44
    %p51 = scmp.eq.s32.totalorder %s13, 1
    %p52 = por %p50, %p51
    %p53 = scmp.ne.s32.totalorder %s44, %s45
    %p54 = scmp.eq.s32.totalorder %s13, 0
    %p55 = por %p53, %p54
    %p56 = scmp.ne.s32.totalorder %s44, %s45
    %p57 = scmp.eq.s32.totalorder %s14, 1
    %p58 = por %p56, %p57
    %p60 = scmp.ne.s32.totalorder %s45, %s59
    %p61 = scmp.eq.s32.totalorder %s14, 0
    %p62 = por %p60, %p61
    %s63 = ssub.s32 %s8, %s15
    %p64 = scmp.eq.s32.totalorder %s63, 0
    %s66 = sadd.s32 %s65, 1
    %s67 = scalar_select %p64, %s65, %s66
    %p70 = pneg %p64
    %p71 = scmp.eq.s32.totalorder %s8, 1
    %p72 = por %p70, %p71
    %p73 = scmp.ne.s32.totalorder %s65, %s68
    %p74 = scmp.eq.s32.totalorder %s8, 0
    %p75 = por %p73, %p74
    %p76 = scmp.ne.s32.totalorder %s65, %s68
    %p77 = scmp.eq.s32.totalorder %s13, 1
    %p78 = por %p76, %p77
    %p79 = scmp.ne.s32.totalorder %s68, %s69
    %p80 = scmp.eq.s32.totalorder %s13, 0
    %p81 = por %p79, %p80
    %p82 = scmp.ne.s32.totalorder %s68, %s69
    %p83 = scmp.eq.s32.totalorder %s14, 1
    %p84 = por %p82, %p83
    %p86 = scmp.ne.s32.totalorder %s69, %s85
    %p87 = scmp.eq.s32.totalorder %s14, 0
    %p88 = por %p86, %p87
    %p89 = scmp.le.s32.totalorder 1, %s8
    %p90 = scmp.lt.s32.totalorder %s8, 3
    %p91 = pnand %p89, %p90
    %p92 = pneg %p91
    // Predicated region
    $region9: #{decode_block_forward.5} parent=5 // pred_check
      _
    $region10: #{decode_block_forward.5} parent=5 // pred_check_branch
      %94 = sbr.rel (%p91) target = $region12
    $region11: #{decode_block_forward.5} parent=5 // pred_region
      %s95 = ssub.s32 %s8, 1
      // Predicated region
      $region13: #{decode_block_forward.5} parent=11 // pred_check
        %p96 = pneg %p55
      $region14: #{decode_block_forward.5} parent=11 // pred_check_branch
        %98 = sbr.rel (%p96) target = $region16
      $region15: #{decode_block_forward.5} parent=11 // pred_region
        _
      $region16: #{decode_block_forward.5} parent=11 // pred_fallthru
        _
    $region12: #{decode_block_forward.5} parent=5 // pred_fallthru
      _
    %p99 = scmp.lt.s32.totalorder %s8, 2
    // Predicated region
    $region17: #{decode_block_forward.5} parent=5 // pred_check
      %p100 = pneg %p99
    $region18: #{decode_block_forward.5} parent=5 // pred_check_branch
      %102 = sbr.rel (%p100) target = $region20
    $region19: #{decode_block_forward.5} parent=5 // pred_region
      // Predicated region
      $region21: #{decode_block_forward.5} parent=19 // pred_check
        %p103 = pneg %p28
      $region22: #{decode_block_forward.5} parent=19 // pred_check_branch
        %105 = sbr.rel (%p103) target = $region24
      $region23: #{decode_block_forward.5} parent=19 // pred_region
        %p106 = scmp.lt.s32.totalorder %s8, 1
        %s107 = scalar_select %p106, %s8, 1
        %s108 = smul.addr %s107, 16
        %s109 = smul.addr %s108, 8
        %s110 = scalar_lea.vmem %s0, %s109
      $region24: #{decode_block_forward.5} parent=19 // pred_fallthru
        _
    $region20: #{decode_block_forward.5} parent=5 // pred_fallthru
      _
    %p111 = scmp.le.s32.totalorder 1, %s8
    %p112 = scmp.lt.s32.totalorder %s8, 3
    %p113 = pnand %p111, %p112
    %p114 = pneg %p113
    // Predicated region
    $region25: #{decode_block_forward.5} parent=5 // pred_check
      _
    $region26: #{decode_block_forward.5} parent=5 // pred_check_branch
      %116 = sbr.rel (%p113) target = $region28
    $region27: #{decode_block_forward.5} parent=5 // pred_region
      %s117 = ssub.s32 %s8, 1
      %p118 = scmp.lt.s32.totalorder %s13, 1
      %s119 = scalar_select %p118, %s13, 1
      %s120 = smul.addr %s119, 16
      %s121 = smul.addr %s120, 8
      %s122 = scalar_lea.vmem %s0, %s121
      %p123 = pneg %p34
      %p124 = pneg %p31
      %p125 = pneg %p55
      %p126 = pneg %p52
      %p127 = pneg %p81
      %p128 = pneg %p78
      %p129 = scmp.lt.s32.totalorder %s13, 1
      %s130 = scalar_select %p129, %s13, 1
      %s131 = smul.addr %s130, 32
      %s132 = smul.addr %s131, 8
      %s133 = scalar_lea.vmem %s2, %s132
      %p134 = scmp.lt.s32.totalorder %s13, 1
      %s135 = scalar_select %p134, %s13, 1
      %s136 = smul.addr %s135, 16
      %s137 = smul.addr %s136, 8
      %s138 = scalar_lea.vmem %s0, %s137
      %p139 = scmp.lt.s32.totalorder %s13, 1
      %s140 = scalar_select %p139, %s13, 1
      %s141 = smul.addr %s140, 32
      %s142 = smul.addr %s141, 8
      %s143 = scalar_lea.vmem %s2, %s142
      %v144 = vld [vmem:[%s1] sm:$0xff]
      %v145 = vld [vmem:[%s1 + $0x8] sm:$0xff]
      %v146 = vld [vmem:[%s1 + $0x10] sm:$0xff]
      %v147 = vld [vmem:[%s1 + $0x18] sm:$0xff]
      %v148 = vld [vmem:[%s1 + $0x20] sm:$0xff]
      %v149 = vld [vmem:[%s1 + $0x28] sm:$0xff]
      %v150 = vld [vmem:[%s1 + $0x30] sm:$0xff]
      %v151 = vld [vmem:[%s1 + $0x38] sm:$0xff]
      %v152 = vld [vmem:[%s138] sm:$0xff]
      %v153 = vld [vmem:[%s138 + $0x8] sm:$0xff]
      %v154 = vld [vmem:[%s138 + $0x10] sm:$0xff]
      %v155 = vld [vmem:[%s138 + $0x18] sm:$0xff]
      %v156 = vld [vmem:[%s138 + $0x20] sm:$0xff]
      %v157 = vld [vmem:[%s138 + $0x28] sm:$0xff]
      %v158 = vld [vmem:[%s138 + $0x30] sm:$0xff]
      %v159 = vld [vmem:[%s138 + $0x38] sm:$0xff]
      %v160 = vld [vmem:[%s138 + $0x40] sm:$0xff]
      %v161 = vld [vmem:[%s138 + $0x48] sm:$0xff]
      %v162 = vld [vmem:[%s138 + $0x50] sm:$0xff]
      %v163 = vld [vmem:[%s138 + $0x58] sm:$0xff]
      %v164 = vld [vmem:[%s138 + $0x60] sm:$0xff]
      %v165 = vld [vmem:[%s138 + $0x68] sm:$0xff]
      %v166 = vld [vmem:[%s138 + $0x70] sm:$0xff]
      %v167 = vld [vmem:[%s138 + $0x78] sm:$0xff]
      %vm168 = vcmask 261120
      %v170 = vsel %vm168, %v144, 0
      %v173 = vsel %vm168, %v145, 0
      %v176 = vsel %vm168, %v146, 0
      %v179 = vsel %vm168, %v147, 0
      %v182 = vsel %vm168, %v148, 0
      %v185 = vsel %vm168, %v149, 0
      %v188 = vsel %vm168, %v150, 0
      %v191 = vsel %vm168, %v151, 0
      %193 = vmatprep.subr.mxu0 0.0
      %194 = vmatpush1.msra.mxu0 0.0
      %195 = vmatprep.subr.mxu0 0.0
      %196 = vmatpush1.msra.mxu0 0.0
      %197 = vmatprep.subr.mxu0 0.0
      %198 = vmatpush1.msra.mxu0 0.0
      %199 = vmatprep.subr.mxu0 0.0
      %200 = vmatpush1.msra.mxu0 0.0
      %201 = vmatprep.subr.mxu0 0.0
      %202 = vmatpush1.msra.mxu0 0.0
      %203 = vmatprep.subr.mxu0 0.0
      %204 = vmatpush1.msra.mxu0 0.0
      %205 = vmatprep.subr.mxu0 0.0
      %206 = vmatpush1.msra.mxu0 0.0
      %207 = vmatprep.subr.mxu0 0.0
      %208 = vmatpush1.msra.mxu0 0.0
      %209 = vmatprep.subr.mxu0 0.0
      %210 = vmatpush1.msra.mxu0 0.0
      %211 = vmatprep.subr.mxu0 0.0
      %212 = vmatpush1.msra.mxu0 0.0
      %213 = vmatprep.subr.mxu0 0.0
      %214 = vmatpush1.msra.mxu0 0.0
      %215 = vmatprep.subr.mxu0 0.0
      %216 = vmatpush1.msra.mxu0 0.0
      %217 = vmatprep.subr.mxu0 %v165
      %218 = vmatpush1.msra.mxu0 %v164
      %219 = vmatprep.subr.mxu0 %v161
      %220 = vmatpush1.msra.mxu0 %v160
      %221 = vmatprep.subr.mxu0 %v157
      %222 = vmatpush1.msra.mxu0 %v156
      %223 = vmatprep.subr.mxu0 %v153
      %224 = vmatpush1.msra.mxu0 %v152
      %225 = vmatprep.subr.mxu0 0.0
      %226 = vmatpush2.msra.mxu0 0.0
      %227 = vmatprep.subr.mxu0 0.0
      %228 = vmatpush2.msra.mxu0 0.0
      %229 = vmatprep.subr.mxu0 0.0
      %230 = vmatpush2.msra.mxu0 0.0
      %231 = vmatprep.subr.mxu0 0.0
      %232 = vmatpush2.msra.mxu0 0.0
      %233 = vmatprep.subr.mxu0 0.0
      %234 = vmatpush2.msra.mxu0 0.0
      %235 = vmatprep.subr.mxu0 0.0
      %236 = vmatpush2.msra.mxu0 0.0
      %237 = vmatprep.subr.mxu0 0.0
      %238 = vmatpush2.msra.mxu0 0.0
      %239 = vmatprep.subr.mxu0 0.0
      %240 = vmatpush2.msra.mxu0 0.0
      %241 = vmatprep.subr.mxu0 0.0
      %242 = vmatpush2.msra.mxu0 0.0
      %243 = vmatprep.subr.mxu0 0.0
      %244 = vmatpush2.msra.mxu0 0.0
      %245 = vmatprep.subr.mxu0 0.0
      %246 = vmatpush2.msra.mxu0 0.0
      %247 = vmatprep.subr.mxu0 0.0
      %248 = vmatpush2.msra.mxu0 0.0
      %249 = vmatprep.subr.mxu0 0.0
      %250 = vmatpush2.msra.mxu0 0.0
      %251 = vmatprep.subr.mxu0 0.0
      %252 = vmatpush2.msra.mxu0 0.0
      %253 = vmatprep.subr.mxu0 0.0
      %254 = vmatpush2.msra.mxu0 0.0
      %255 = vmatprep.subr.mxu0 0.0
      %256 = vmatpush2.msra.mxu0 0.0
      %257 = vmatprep.mubr.f32.mxu0 0.0
      %258 = vmatmul.mubr.f32.gmra.mxu0 %v170
      %v259 = vpop.f32.mrf.mxu0
      %v260 = vadd.f32 0.0, %v259
      %v261 = vpop.f32.mrf.mxu0
      %v262 = vadd.f32 0.0, %v261
      %263 = vmatprep.mubr.f32.mxu0 0.0
      %264 = vmatmul.mubr.f32.gmra.mxu0 %v173
      %v265 = vpop.f32.mrf.mxu0
      %v266 = vadd.f32 0.0, %v265
      %v267 = vpop.f32.mrf.mxu0
      %v268 = vadd.f32 0.0, %v267
      %269 = vmatprep.mubr.f32.mxu0 0.0
      %270 = vmatmul.mubr.f32.gmra.mxu0 %v176
      %v271 = vpop.f32.mrf.mxu0
      %v272 = vadd.f32 0.0, %v271
      %v273 = vpop.f32.mrf.mxu0
      %v274 = vadd.f32 0.0, %v273
      %275 = vmatprep.mubr.f32.mxu0 0.0
      %276 = vmatmul.mubr.f32.gmra.mxu0 %v179
      %v277 = vpop.f32.mrf.mxu0
      %v278 = vadd.f32 0.0, %v277
      %v279 = vpop.f32.mrf.mxu0
      %v280 = vadd.f32 0.0, %v279
      %281 = vmatprep.mubr.f32.mxu0 0.0
      %282 = vmatmul.mubr.f32.gmra.mxu0 %v182
      %v283 = vpop.f32.mrf.mxu0
      %v284 = vadd.f32 0.0, %v283
      %v285 = vpop.f32.mrf.mxu0
      %v286 = vadd.f32 0.0, %v285
      %287 = vmatprep.mubr.f32.mxu0 0.0
      %288 = vmatmul.mubr.f32.gmra.mxu0 %v185
      %v289 = vpop.f32.mrf.mxu0
      %v290 = vadd.f32 0.0, %v289
      %v291 = vpop.f32.mrf.mxu0
      %v292 = vadd.f32 0.0, %v291
      %293 = vmatprep.mubr.f32.mxu0 0.0
      %294 = vmatmul.mubr.f32.gmra.mxu0 %v188
      %v295 = vpop.f32.mrf.mxu0
      %v296 = vadd.f32 0.0, %v295
      %v297 = vpop.f32.mrf.mxu0
      %v298 = vadd.f32 0.0, %v297
      %299 = vmatprep.mubr.f32.mxu0 0.0
      %300 = vmatmul.mubr.f32.gmra.mxu0 %v191
      %v301 = vpop.f32.mrf.mxu0
      %v302 = vadd.f32 0.0, %v301
      %v303 = vpop.f32.mrf.mxu0
      %v304 = vadd.f32 0.0, %v303
      %305 = vdwg.mxu0
      %306 = vmatprep.subr.mxu0 0.0
      %307 = vmatpush1.msra.mxu0 0.0
      %308 = vmatprep.subr.mxu0 0.0
      %309 = vmatpush1.msra.mxu0 0.0
      %310 = vmatprep.subr.mxu0 0.0
      %311 = vmatpush1.msra.mxu0 0.0
      %312 = vmatprep.subr.mxu0 0.0
      %313 = vmatpush1.msra.mxu0 0.0
      %314 = vmatprep.subr.mxu0 0.0
      %315 = vmatpush1.msra.mxu0 0.0
      %316 = vmatprep.subr.mxu0 0.0
      %317 = vmatpush1.msra.mxu0 0.0
      %318 = vmatprep.subr.mxu0 0.0
      %319 = vmatpush1.msra.mxu0 0.0
      %320 = vmatprep.subr.mxu0 0.0
      %321 = vmatpush1.msra.mxu0 0.0
      %322 = vmatprep.subr.mxu0 0.0
      %323 = vmatpush1.msra.mxu0 0.0
      %324 = vmatprep.subr.mxu0 0.0
      %325 = vmatpush1.msra.mxu0 0.0
      %326 = vmatprep.subr.mxu0 0.0
      %327 = vmatpush1.msra.mxu0 0.0
      %328 = vmatprep.subr.mxu0 0.0
      %329 = vmatpush1.msra.mxu0 0.0
      %330 = vmatprep.subr.mxu0 %v167
      %331 = vmatpush1.msra.mxu0 %v166
      %332 = vmatprep.subr.mxu0 %v163
      %333 = vmatpush1.msra.mxu0 %v162
      %334 = vmatprep.subr.mxu0 %v159
      %335 = vmatpush1.msra.mxu0 %v158
      %336 = vmatprep.subr.mxu0 %v155
      %337 = vmatpush1.msra.mxu0 %v154
      %338 = vmatprep.subr.mxu0 0.0
      %339 = vmatpush2.msra.mxu0 0.0
      %340 = vmatprep.subr.mxu0 0.0
      %341 = vmatpush2.msra.mxu0 0.0
      %342 = vmatprep.subr.mxu0 0.0
      %343 = vmatpush2.msra.mxu0 0.0
      %344 = vmatprep.subr.mxu0 0.0
      %345 = vmatpush2.msra.mxu0 0.0
      %346 = vmatprep.subr.mxu0 0.0
      %347 = vmatpush2.msra.mxu0 0.0
      %348 = vmatprep.subr.mxu0 0.0
      %349 = vmatpush2.msra.mxu0 0.0
      %350 = vmatprep.subr.mxu0 0.0
      %351 = vmatpush2.msra.mxu0 0.0
      %352 = vmatprep.subr.mxu0 0.0
      %353 = vmatpush2.msra.mxu0 0.0
      %354 = vmatprep.subr.mxu0 0.0
      %355 = vmatpush2.msra.mxu0 0.0
      %356 = vmatprep.subr.mxu0 0.0
      %357 = vmatpush2.msra.mxu0 0.0
      %358 = vmatprep.subr.mxu0 0.0
      %359 = vmatpush2.msra.mxu0 0.0
      %360 = vmatprep.subr.mxu0 0.0
      %361 = vmatpush2.msra.mxu0 0.0
      %362 = vmatprep.subr.mxu0 0.0
      %363 = vmatpush2.msra.mxu0 0.0
      %364 = vmatprep.subr.mxu0 0.0
      %365 = vmatpush2.msra.mxu0 0.0
      %366 = vmatprep.subr.mxu0 0.0
      %367 = vmatpush2.msra.mxu0 0.0
      %368 = vmatprep.subr.mxu0 0.0
      %369 = vmatpush2.msra.mxu0 0.0
      %370 = vmatprep.mubr.f32.mxu0 0.0
      %371 = vmatmul.mubr.f32.gmra.mxu0 %v170
      %v372 = vpop.f32.mrf.mxu0
      %v373 = vadd.f32 0.0, %v372
      %v374 = vpop.f32.mrf.mxu0
      %v375 = vadd.f32 0.0, %v374
      %376 = vmatprep.mubr.f32.mxu0 0.0
      %377 = vmatmul.mubr.f32.gmra.mxu0 %v173
      %v378 = vpop.f32.mrf.mxu0
      %v379 = vadd.f32 0.0, %v378
      %v380 = vpop.f32.mrf.mxu0
      %v381 = vadd.f32 0.0, %v380
      %382 = vmatprep.mubr.f32.mxu0 0.0
      %383 = vmatmul.mubr.f32.gmra.mxu0 %v176
      %v384 = vpop.f32.mrf.mxu0
      %v385 = vadd.f32 0.0, %v384
      %v386 = vpop.f32.mrf.mxu0
      %v387 = vadd.f32 0.0, %v386
      %388 = vmatprep.mubr.f32.mxu0 0.0
      %389 = vmatmul.mubr.f32.gmra.mxu0 %v179
      %v390 = vpop.f32.mrf.mxu0
      %v391 = vadd.f32 0.0, %v390
      %v392 = vpop.f32.mrf.mxu0
      %v393 = vadd.f32 0.0, %v392
      %394 = vmatprep.mubr.f32.mxu0 0.0
      %395 = vmatmul.mubr.f32.gmra.mxu0 %v182
      %v396 = vpop.f32.mrf.mxu0
      %v397 = vadd.f32 0.0, %v396
      %v398 = vpop.f32.mrf.mxu0
      %v399 = vadd.f32 0.0, %v398
      %400 = vmatprep.mubr.f32.mxu0 0.0
      %401 = vmatmul.mubr.f32.gmra.mxu0 %v185
      %v402 = vpop.f32.mrf.mxu0
      %v403 = vadd.f32 0.0, %v402
      %v404 = vpop.f32.mrf.mxu0
      %v405 = vadd.f32 0.0, %v404
      %406 = vmatprep.mubr.f32.mxu0 0.0
      %407 = vmatmul.mubr.f32.gmra.mxu0 %v188
      %v408 = vpop.f32.mrf.mxu0
      %v409 = vadd.f32 0.0, %v408
      %v410 = vpop.f32.mrf.mxu0
      %v411 = vadd.f32 0.0, %v410
      %412 = vmatprep.mubr.f32.mxu0 0.0
      %413 = vmatmul.mubr.f32.gmra.mxu0 %v191
      %v414 = vpop.f32.mrf.mxu0
      %v415 = vadd.f32 0.0, %v414
      %v416 = vpop.f32.mrf.mxu0
      %v417 = vadd.f32 0.0, %v416
      %418 = vdwg.mxu0
      %419 = vst [vmem:[%s143] sm:$0xff] %v260
      %420 = vst [vmem:[%s143 + $0x8] sm:$0xff] %v262
      %421 = vst [vmem:[%s143 + $0x10] sm:$0xff] %v373
      %422 = vst [vmem:[%s143 + $0x18] sm:$0xff] %v375
      %423 = vst [vmem:[%s143 + $0x20] sm:$0xff] %v266
      %424 = vst [vmem:[%s143 + $0x28] sm:$0xff] %v268
      %425 = vst [vmem:[%s143 + $0x30] sm:$0xff] %v379
      %426 = vst [vmem:[%s143 + $0x38] sm:$0xff] %v381
      %427 = vst [vmem:[%s143 + $0x40] sm:$0xff] %v272
      %428 = vst [vmem:[%s143 + $0x48] sm:$0xff] %v274
      %429 = vst [vmem:[%s143 + $0x50] sm:$0xff] %v385
      %430 = vst [vmem:[%s143 + $0x58] sm:$0xff] %v387
      %431 = vst [vmem:[%s143 + $0x60] sm:$0xff] %v278
      %432 = vst [vmem:[%s143 + $0x68] sm:$0xff] %v280
      %433 = vst [vmem:[%s143 + $0x70] sm:$0xff] %v391
      %434 = vst [vmem:[%s143 + $0x78] sm:$0xff] %v393
      %435 = vst [vmem:[%s143 + $0x80] sm:$0xff] %v284
      %436 = vst [vmem:[%s143 + $0x88] sm:$0xff] %v286
      %437 = vst [vmem:[%s143 + $0x90] sm:$0xff] %v397
      %438 = vst [vmem:[%s143 + $0x98] sm:$0xff] %v399
      %439 = vst [vmem:[%s143 + $0xa0] sm:$0xff] %v290
      %440 = vst [vmem:[%s143 + $0xa8] sm:$0xff] %v292
      %441 = vst [vmem:[%s143 + $0xb0] sm:$0xff] %v403
      %442 = vst [vmem:[%s143 + $0xb8] sm:$0xff] %v405
      %443 = vst [vmem:[%s143 + $0xc0] sm:$0xff] %v296
      %444 = vst [vmem:[%s143 + $0xc8] sm:$0xff] %v298
      %445 = vst [vmem:[%s143 + $0xd0] sm:$0xff] %v409
      %446 = vst [vmem:[%s143 + $0xd8] sm:$0xff] %v411
      %447 = vst [vmem:[%s143 + $0xe0] sm:$0xff] %v302
      %448 = vst [vmem:[%s143 + $0xe8] sm:$0xff] %v304
      %449 = vst [vmem:[%s143 + $0xf0] sm:$0xff] %v415
      %450 = vst [vmem:[%s143 + $0xf8] sm:$0xff] %v417
      %p451 = scmp.lt.s32.totalorder %s13, 1
      %s452 = scalar_select %p451, %s13, 1
      %s453 = smul.addr %s452, 32
      %s454 = smul.addr %s453, 8
      %s455 = scalar_lea.vmem %s2, %s454
      // Predicated region
      $region29: #{decode_block_forward.5} parent=27 // pred_check
        %p456 = pneg %p78
      $region30: #{decode_block_forward.5} parent=27 // pred_check_branch
        %458 = sbr.rel (%p456) target = $region32
      $region31: #{decode_block_forward.5} parent=27 // pred_region
        _
      $region32: #{decode_block_forward.5} parent=27 // pred_fallthru
        _
    $region28: #{decode_block_forward.5} parent=5 // pred_fallthru
      _
    %p459 = scmp.le.s32.totalorder 2, %s8
    // Predicated region
    $region33: #{decode_block_forward.5} parent=5 // pred_check
      %p460 = pneg %p459
    $region34: #{decode_block_forward.5} parent=5 // pred_check_branch
      %462 = sbr.rel (%p460) target = $region36
    $region35: #{decode_block_forward.5} parent=5 // pred_region
      %s463 = ssub.s32 %s8, 2
      // Predicated region
      $region37: #{decode_block_forward.5} parent=35 // pred_check
        %p464 = pneg %p84
      $region38: #{decode_block_forward.5} parent=35 // pred_check_branch
        %466 = sbr.rel (%p464) target = $region40
      $region39: #{decode_block_forward.5} parent=35 // pred_region
        %p467 = scmp.lt.s32.totalorder %s14, 1
        %s468 = scalar_select %p467, %s14, 1
        %s469 = smul.addr %s468, 32
        %s470 = smul.addr %s469, 8
        %s471 = scalar_lea.vmem %s2, %s470
      $region40: #{decode_block_forward.5} parent=35 // pred_fallthru
        _
    $region36: #{decode_block_forward.5} parent=5 // pred_fallthru
      _
  $region6: #{decode_block_forward.5} parent=0 // loop_footer
    %s12 = sadd.s32 1, %s8
  $region7: #{decode_block_forward.5} parent=0 // loop_footer_branch
    %7 = sbr.rel target = $region3
  $region8: #{decode_block_forward.5} parent=0 // loop_exit
    _

</llo_original>
